<compile_context>
chip_gen: v6e
topology: v6e:2x2x1
jax: 0.10.0
libtpu: 0.0.40
codegen_flags: <defaults>
</compile_context>

<pallas_src>
import functools
import math

import jax
import jax.numpy as jnp
from jax.experimental import pallas as pl
from jax.experimental.pallas import tpu as pltpu

LANE = 128  # TPU lane width.


def _default_vmem_limit():
    # Generation-aware scoped-VMEM budget: half of physical VMEM (~32 MiB on v7x,
    # ~64 MiB on v5e/v6e).  Falls back to a safe 32 MiB if the query fails.
    try:
        cap = int(pltpu.get_tpu_info().vmem_capacity_bytes)
        return min(cap // 2, 96 * 1024 * 1024)
    except Exception:
        return 32 * 1024 * 1024


_VMEM_LIMIT = _default_vmem_limit()


def _round_up(x, m):
    return (x + m - 1) // m * m


def _row_tile(H, cap=64):
    """Largest row-tile size <= cap that divides H and leaves >= 2 row tiles (so the
    spatial grid axis can feed both v7x TensorCores).  Falls back to H for tiny maps."""
    best = 1
    for th in range(1, min(H, cap) + 1):
        if H % th == 0 and H // th >= 2:
            best = th
    if best == 1 and H <= cap:
        best = H
    return best


def _row_windows(x, th, dtype):
    """x: (N, H, W, C) -> (N, H//th, th+2, W+2, C) overlapping row windows with a
    1-pixel zero halo.
    TODO(synk): the 2 halo rows are duplicated in HBM (~2/th extra input traffic); an
    in-kernel halo DMA (memory_space=pl.ANY + make_async_copy) would remove it."""
    N, H, W, C = x.shape
    xp = jnp.pad(x, ((0, 0), (1, 1), (1, 1), (0, 0)))
    n_rt = H // th
    xw = jnp.stack([xp[:, i * th:i * th + th + 2] for i in range(n_rt)], axis=1)
    return xw.astype(dtype), n_rt


# ----------------------------------------------------------------------------
# Pallas kernels
# ----------------------------------------------------------------------------

def _conv_taps(x_ref, w_ref, th, W, Cin):
    """Accumulate the 9 taps of a 3x3 'same' conv on one (th+2, W+2, Cin) row window.
    Returns a (th*W, Cout) f32 accumulator.
    TODO(synk): for Cin=3 a single K=27 contraction would fill the MXU better; the
    per-tap form is kept as the single proven conv path (the backbone is HBM-bound)."""
    cout = w_ref.shape[-1]
    acc = jnp.zeros((th * W, cout), jnp.float32)
    for kh in range(3):
        for kw in range(3):
            xt = x_ref[kh:kh + th, kw:kw + W, :].reshape(th * W, Cin)
            acc = acc + jnp.dot(xt, w_ref[kh * 3 + kw],
                                preferred_element_type=jnp.float32)
    return acc


def _conv3x3_kernel(x_ref, w_ref, b_ref, o_ref, *, th, W, Cin, relu):
    acc = _conv_taps(x_ref, w_ref, th, W, Cin) + b_ref[...]
    if relu:
        acc = jnp.maximum(acc, 0.0)
    o_ref[...] = acc.astype(o_ref.dtype)


def _conv3x3_head_kernel(x_ref, w_ref, b_ref, hw_ref, hb_ref, o_ref, *, th, W, Cin):
    # 3x3 conv + ReLU, then the fused RPN (cls || box) head matmul.  The conv
    # activation tile stays in VMEM; only the small head output is stored.
    t = jnp.maximum(_conv_taps(x_ref, w_ref, th, W, Cin) + b_ref[...], 0.0)
    head = jnp.dot(t.astype(hw_ref.dtype), hw_ref[...],
                   preferred_element_type=jnp.float32) + hb_ref[...]
    o_ref[...] = head.astype(o_ref.dtype)


def _roi_head_kernel(x_ref, w1_ref, b1_ref, w2_ref, b2_ref, wh_ref, bh_ref, o_ref):
    # fc1 -> relu -> fc2 -> relu -> fused (cls || bbox) head on one M tile.
    h = jnp.dot(x_ref[...], w1_ref[...], preferred_element_type=jnp.float32) + b1_ref[...]
    h = jnp.maximum(h, 0.0).astype(w2_ref.dtype)
    h = jnp.dot(h, w2_ref[...], preferred_element_type=jnp.float32) + b2_ref[...]
    h = jnp.maximum(h, 0.0).astype(wh_ref.dtype)
    out = jnp.dot(h, wh_ref[...], preferred_element_type=jnp.float32) + bh_ref[...]
    o_ref[...] = out.astype(o_ref.dtype)


# ----------------------------------------------------------------------------
# Kernel wrappers
# ----------------------------------------------------------------------------

def conv3x3_same(x, w9, b, *, relu=False, compute_dtype=jnp.bfloat16,
                 out_dtype=jnp.float32):
    """x: (N,H,W,Cin), w9: (9,Cin,Cout), b: (Cout,) -> (N,H,W,Cout)."""
    N, H, W, Cin = x.shape
    Cout = w9.shape[-1]
    th = _row_tile(H)
    xw, n_rt = _row_windows(x, th, compute_dtype)
    out = pl.pallas_call(
        functools.partial(_conv3x3_kernel, th=th, W=W, Cin=Cin, relu=relu),
        out_shape=jax.ShapeDtypeStruct((N, n_rt, th * W, Cout), out_dtype),
        grid=(N, n_rt),
        in_specs=[
            pl.BlockSpec((None, None, th + 2, W + 2, Cin),
                         lambda n, r: (n, r, 0, 0, 0)),
            pl.BlockSpec((9, Cin, Cout), lambda n, r: (0, 0, 0)),
            pl.BlockSpec((1, Cout), lambda n, r: (0, 0)),
        ],
        out_specs=pl.BlockSpec((None, None, th * W, Cout),
                               lambda n, r: (n, r, 0, 0)),
        compiler_params=pltpu.CompilerParams(
            dimension_semantics=("parallel", "parallel"),
            vmem_limit_bytes=_VMEM_LIMIT),
    )(xw, w9.astype(compute_dtype), b.reshape(1, Cout).astype(jnp.float32))
    return out.reshape(N, H, W, Cout)


def rpn_conv_head(x, w9, b, hw, hb):
    """Fused RPN 3x3 conv + ReLU + (cls || box) head.
    x: (N,H,W,C), w9: (9,C,C), b: (C,), hw: (C,5A), hb: (5A,) -> (N, H*W, 5A) f32."""
    N, H, W, Cin = x.shape
    Cmid = w9.shape[-1]
    Hout = hw.shape[-1]
    th = _row_tile(H)
    xw, n_rt = _row_windows(x, th, jnp.bfloat16)
    out = pl.pallas_call(
        functools.partial(_conv3x3_head_kernel, th=th, W=W, Cin=Cin),
        out_shape=jax.ShapeDtypeStruct((N, n_rt, th * W, Hout), jnp.float32),
        grid=(N, n_rt),
        in_specs=[
            pl.BlockSpec((None, None, th + 2, W + 2, Cin),
                         lambda n, r: (n, r, 0, 0, 0)),
            pl.BlockSpec((9, Cin, Cmid), lambda n, r: (0, 0, 0)),
            pl.BlockSpec((1, Cmid), lambda n, r: (0, 0)),
            pl.BlockSpec((Cmid, Hout), lambda n, r: (0, 0)),
            pl.BlockSpec((1, Hout), lambda n, r: (0, 0)),
        ],
        out_specs=pl.BlockSpec((None, None, th * W, Hout),
                               lambda n, r: (n, r, 0, 0)),
        compiler_params=pltpu.CompilerParams(
            dimension_semantics=("parallel", "parallel"),
            vmem_limit_bytes=_VMEM_LIMIT),
    )(xw, w9.astype(jnp.bfloat16), b.reshape(1, Cmid).astype(jnp.float32),
      hw.astype(jnp.bfloat16), hb.reshape(1, Hout).astype(jnp.float32))
    return out.reshape(N, H * W, Hout)


def roi_head_mlp(x, w1, b1, w2, b2, wh, bh, tm=256):
    """x: (M, Din) -> (M, wh.shape[-1]) f32.  Tiled over M ('parallel')."""
    M, Din = x.shape
    Hout = wh.shape[-1]
    tm = min(tm, _round_up(M, 8))
    Mp = _round_up(M, tm)
    xp = jnp.pad(x.astype(jnp.bfloat16), ((0, Mp - M), (0, 0)))
    out = pl.pallas_call(
        _roi_head_kernel,
        out_shape=jax.ShapeDtypeStruct((Mp, Hout), jnp.float32),
        grid=(Mp // tm,),
        in_specs=[
            pl.BlockSpec((tm, Din), lambda i: (i, 0)),
            pl.BlockSpec(w1.shape, lambda i: (0, 0)),
            pl.BlockSpec((1, b1.shape[-1]), lambda i: (0, 0)),
            pl.BlockSpec(w2.shape, lambda i: (0, 0)),
            pl.BlockSpec((1, b2.shape[-1]), lambda i: (0, 0)),
            pl.BlockSpec(wh.shape, lambda i: (0, 0)),
            pl.BlockSpec((1, Hout), lambda i: (0, 0)),
        ],
        out_specs=pl.BlockSpec((tm, Hout), lambda i: (i, 0)),
        compiler_params=pltpu.CompilerParams(
            dimension_semantics=("parallel",),
            vmem_limit_bytes=_VMEM_LIMIT),
    )(xp, w1.astype(jnp.bfloat16), b1.reshape(1, -1).astype(jnp.float32),
      w2.astype(jnp.bfloat16), b2.reshape(1, -1).astype(jnp.float32),
      wh.astype(jnp.bfloat16), bh.reshape(1, -1).astype(jnp.float32))
    return out[:M]


# ----------------------------------------------------------------------------
# Box utilities (plain JAX glue, fully batched)
# ----------------------------------------------------------------------------

def make_anchors(H, W, sizes):
    ys, xs = jnp.meshgrid(jnp.arange(H, dtype=jnp.float32) + 0.5,
                          jnp.arange(W, dtype=jnp.float32) + 0.5, indexing="ij")
    centers = jnp.stack([xs, ys], axis=-1).reshape(H * W, 1, 2)      # cx, cy
    half = jnp.asarray(sizes, jnp.float32).reshape(1, -1, 1) / 2.0
    anchors = jnp.concatenate([centers - half, centers + half], axis=-1)
    return anchors.reshape(-1, 4)                                    # (H*W*A, 4)


_BBOX_XFORM_CLIP = math.log(1000.0 / 16.0)


def decode_boxes(deltas, boxes, weights=(1.0, 1.0, 1.0, 1.0)):
    wx, wy, ww, wh = weights
    w = boxes[..., 2] - boxes[..., 0]
    h = boxes[..., 3] - boxes[..., 1]
    cx = boxes[..., 0] + 0.5 * w
    cy = boxes[..., 1] + 0.5 * h
    dx = deltas[..., 0] / wx
    dy = deltas[..., 1] / wy
    dw = deltas[..., 2] / ww
    dh = deltas[..., 3] / wh
    ncx = dx * w + cx
    ncy = dy * h + cy
    nw = jnp.exp(jnp.clip(dw, -_BBOX_XFORM_CLIP, _BBOX_XFORM_CLIP)) * w
    nh = jnp.exp(jnp.clip(dh, -_BBOX_XFORM_CLIP, _BBOX_XFORM_CLIP)) * h
    return jnp.stack([ncx - 0.5 * nw, ncy - 0.5 * nh,
                      ncx + 0.5 * nw, ncy + 0.5 * nh], axis=-1)


def clip_boxes(boxes, H, W):
    return jnp.stack([jnp.clip(boxes[..., 0], 0.0, float(W)),
                      jnp.clip(boxes[..., 1], 0.0, float(H)),
                      jnp.clip(boxes[..., 2], 0.0, float(W)),
                      jnp.clip(boxes[..., 3], 0.0, float(H))], axis=-1)


def roi_pool_nearest(feat, boxes, out_size=2):
    """feat: (H,W,C), boxes: (K,4) -> (K,out_size,out_size,C) nearest-neighbor pool."""
    # TODO(synk): true RoIAlign (bilinear, data-dependent gather) has no clean Pallas
    # tile expression; the gather stays in plain JAX (vmapped over the batch).
    H, W, _ = feat.shape
    x1, y1, x2, y2 = boxes[..., 0], boxes[..., 1], boxes[..., 2], boxes[..., 3]
    t = (jnp.arange(out_size, dtype=jnp.float32) + 0.5) / out_size
    sx = x1[:, None] + t[None, :] * (x2 - x1)[:, None]
    sy = y1[:, None] + t[None, :] * (y2 - y1)[:, None]
    ix = jnp.clip(jnp.floor(sx), 0, W - 1).astype(jnp.int32)
    iy = jnp.clip(jnp.floor(sy), 0, H - 1).astype(jnp.int32)
    return feat[iy[:, :, None], ix[:, None, :]]                      # (K,P,P,C)


# ----------------------------------------------------------------------------
# GeneralizedRCNN (inference path; losses are empty dicts as in eval mode)
# ----------------------------------------------------------------------------

class GeneralizedRCNN:
    def __init__(self, params, *, feat_ch=16, num_anchors=3, anchor_sizes=(4., 8., 16.),
                 num_classes=5, pre_topk=8, pooled=2, hidden_pad=LANE):
        self.feat_ch = feat_ch
        self.A = num_anchors
        self.anchor_sizes = anchor_sizes
        self.num_classes = num_classes
        self.pre_topk = pre_topk
        self.pooled = pooled

        mean = jnp.asarray([0.485, 0.456, 0.406], jnp.float32)
        inv_std = 1.0 / jnp.asarray([0.229, 0.224, 0.225], jnp.float32)
        self.mean = mean.reshape(1, 1, 1, 3)

        # Backbone 3x3 conv: fold inv_std into the weights (mean is subtracted in the
        # transform so pad semantics are preserved).  Channels keep their natural
        # width (no 16->128 lane padding anywhere in HBM).
        w_bb = params["backbone_w"] * inv_std.reshape(1, 1, 3, 1)          # (3,3,3,16)
        self.backbone_w9 = w_bb.reshape(9, 3, feat_ch).astype(jnp.float32)
        self.backbone_b = params["backbone_b"].astype(jnp.float32)

        # RPN 3x3 conv + fused cls/box head (bf16 MXU weights, f32 biases).
        self.rpn_conv_w9 = params["rpn_conv_w"].reshape(
            9, feat_ch, feat_ch).astype(jnp.bfloat16)
        self.rpn_conv_b = params["rpn_conv_b"].astype(jnp.float32)
        w_head = jnp.concatenate([params["rpn_cls_w"], params["rpn_box_w"]], axis=1)
        self.rpn_head_w = w_head.astype(jnp.bfloat16)                      # (16, 5A)
        self.rpn_head_b = jnp.concatenate(
            [params["rpn_cls_b"], params["rpn_box_b"]]).astype(jnp.float32)

        # RoI heads: zero-pad the hidden dim 32->128 (lane-dense fc outputs) and fuse
        # the cls + bbox heads, lane-padding their output.
        hidden = params["fc1_w"].shape[-1]
        hp = hidden_pad
        self.fc1_w = jnp.pad(params["fc1_w"],
                             ((0, 0), (0, hp - hidden))).astype(jnp.bfloat16)
        self.fc1_b = jnp.pad(params["fc1_b"], ((0, hp - hidden),)).astype(jnp.float32)
        self.fc2_w = jnp.pad(params["fc2_w"],
                             ((0, hp - hidden), (0, hp - hidden))).astype(jnp.bfloat16)
        self.fc2_b = jnp.pad(params["fc2_b"], ((0, hp - hidden),)).astype(jnp.float32)
        w_det = jnp.concatenate([params["cls_w"], params["bbox_w"]], axis=1)  # (32,5nc)
        det_out = w_det.shape[-1]
        self.det_head_w = jnp.pad(
            w_det, ((0, hp - hidden), (0, LANE - det_out))).astype(jnp.bfloat16)
        self.det_head_b = jnp.pad(
            jnp.concatenate([params["cls_b"], params["bbox_b"]]),
            ((0, LANE - det_out),)).astype(jnp.float32)

        # Invariant: padded weight rows/cols and bias entries are exactly zero, so the
        # padded hidden channels stay zero through ReLU and never leak into outputs.
        assert bool(jnp.all(self.fc2_w[hidden:, :] == 0))
        assert bool(jnp.all(self.det_head_w[hidden:, :] == 0))

    # --- transform (mean-subtract + batch; inv_std lives in the backbone weights) ---
    def transform(self, images):
        x = jnp.stack(images, 0).transpose(0, 2, 3, 1).astype(jnp.float32)  # NCHW->NHWC
        x = x - self.mean
        image_sizes = [(int(x.shape[1]), int(x.shape[2]))] * int(x.shape[0])
        return x, image_sizes

    # --- backbone -------------------------------------------------------------
    def backbone(self, x):
        # Cin=3 is bandwidth-trivial, so operands stay f32 there (proven layout for
        # the odd 3-lane channel dim); features come out bf16 to halve HBM traffic.
        return conv3x3_same(x, self.backbone_w9, self.backbone_b, relu=True,
                            compute_dtype=jnp.float32, out_dtype=jnp.bfloat16)

    # --- rpn ------------------------------------------------------------------
    def rpn(self, features, image_sizes):
        feats = features["0"]                                  # (N, H, W, C) bf16
        N, H, W, _ = feats.shape
        A = self.A
        head = rpn_conv_head(feats, self.rpn_conv_w9, self.rpn_conv_b,
                             self.rpn_head_w, self.rpn_head_b)   # (N, H*W, 5A) f32
        logits = head[..., :A].reshape(N, H * W * A)
        deltas = head[..., A:A + 4 * A].reshape(N, H * W * A, 4)
        anchors = make_anchors(H, W, self.anchor_sizes)          # (H*W*A, 4)

        scores = jax.nn.sigmoid(logits)
        _, idx = jax.lax.top_k(scores, self.pre_topk)                     # (N, k)
        sel_deltas = jnp.take_along_axis(deltas, idx[..., None], axis=1)  # (N, k, 4)
        sel_anchors = anchors[idx]                                        # (N, k, 4)
        boxes = decode_boxes(sel_deltas, sel_anchors)
        ih, iw = image_sizes[0]
        proposals = clip_boxes(boxes, ih, iw)                             # (N, k, 4)
        # TODO(synk): per-level NMS / score filtering of RPN proposals is omitted.
        return proposals, {}

    # --- roi heads ------------------------------------------------------------
    def roi_heads(self, features, proposals, image_sizes):
        feats = features["0"]                                  # (N, H, W, C) bf16
        N, K = proposals.shape[:2]
        nc = self.num_classes
        pooled_feats = jax.vmap(
            lambda f, b: roi_pool_nearest(f, b, self.pooled))(feats, proposals)
        x = pooled_feats.reshape(N * K, -1)                    # (N*K, P*P*C)
        out = roi_head_mlp(x, self.fc1_w, self.fc1_b, self.fc2_w, self.fc2_b,
                           self.det_head_w, self.det_head_b)   # (N*K, 128) f32
        cls_logits = out[:, :nc]
        box_deltas = out[:, nc:nc + 4 * nc].reshape(N, K, nc, 4)

        probs = jax.nn.softmax(cls_logits, axis=-1).reshape(N, K, nc)
        labels = jnp.argmax(probs[..., 1:], axis=-1) + 1                  # (N, K)
        scores = jnp.take_along_axis(probs, labels[..., None], axis=-1)[..., 0]
        sel_bd = jnp.take_along_axis(
            box_deltas, labels[..., None, None], axis=2)[:, :, 0, :]      # (N, K, 4)
        boxes = decode_boxes(sel_bd, proposals, weights=(10., 10., 5., 5.))
        ih, iw = image_sizes[0]
        boxes = clip_boxes(boxes, ih, iw)
        detections = [{"boxes": boxes[n], "labels": labels[n], "scores": scores[n]}
                      for n in range(N)]
        return detections, {}

    # --- postprocess ----------------------------------------------------------
    def postprocess(self, detections, image_sizes, original_image_sizes):
        out = []
        for det, (rh, rw), (oh, ow) in zip(detections, image_sizes, original_image_sizes):
            scale = jnp.asarray([ow / rw, oh / rh, ow / rw, oh / rh], jnp.float32)
            out.append({"boxes": det["boxes"] * scale[None, :],
                        "labels": det["labels"], "scores": det["scores"]})
        return out

    # --- forward (mirrors the PyTorch GenralizedRCNN.forward, eval mode) -----
    def forward(self, images, targets=None):
        original_image_sizes = []
        for img in images:
            h, w = img.shape[-2:]
            original_image_sizes.append((int(h), int(w)))
        batched, image_sizes = self.transform(images)
        feats = self.backbone(batched)
        features = {"0": feats}
        proposals, proposal_losses = self.rpn(features, image_sizes)
        detections, detector_losses = self.roi_heads(features, proposals, image_sizes)
        detections = self.postprocess(detections, image_sizes, original_image_sizes)
        losses = {}
        losses.update(detector_losses)
        losses.update(proposal_losses)
        return losses, detections


# ----------------------------------------------------------------------------
# Deterministic parameter init (PyTorch-style raw shapes; padding/fusion is done
# inside the model constructor)
# ----------------------------------------------------------------------------

def init_params(key, cin=3, feat_ch=16, num_anchors=3, num_classes=5, pooled=2, hidden=32):
    keys = jax.random.split(key, 8)

    def w(k, shape):
        fan_in = 1
        for s in shape[:-1]:
            fan_in *= s
        return (jax.random.normal(k, shape, jnp.float32) / jnp.sqrt(float(fan_in)))

    fc_in = pooled * pooled * feat_ch
    return {
        "backbone_w": w(keys[0], (3, 3, cin, feat_ch)),
        "backbone_b": jnp.zeros((feat_ch,), jnp.float32),
        "rpn_conv_w": w(keys[1], (3, 3, feat_ch, feat_ch)),
        "rpn_conv_b": jnp.zeros((feat_ch,), jnp.float32),
        "rpn_cls_w": w(keys[2], (feat_ch, num_anchors)),
        "rpn_cls_b": jnp.zeros((num_anchors,), jnp.float32),
        "rpn_box_w": w(keys[3], (feat_ch, num_anchors * 4)),
        "rpn_box_b": jnp.zeros((num_anchors * 4,), jnp.float32),
        "fc1_w": w(keys[4], (fc_in, hidden)),
        "fc1_b": jnp.zeros((hidden,), jnp.float32),
        "fc2_w": w(keys[5], (hidden, hidden)),
        "fc2_b": jnp.zeros((hidden,), jnp.float32),
        "cls_w": w(keys[6], (hidden, num_classes)),
        "cls_b": jnp.zeros((num_classes,), jnp.float32),
        "bbox_w": w(keys[7], (hidden, num_classes * 4)),
        "bbox_b": jnp.zeros((num_classes * 4,), jnp.float32),
    }


# ----------------------------------------------------------------------------

if __name__ == "__main__":
    key = jax.random.PRNGKey(0)
    k_img, k_par = jax.random.split(key)
    # Two small NCHW images (as the PyTorch module receives list[Tensor] CHW).
    imgs = [jax.random.uniform(jax.random.fold_in(k_img, i), (3, 16, 16), jnp.float32)
            for i in range(2)]

    params = init_params(k_par)
    model = GeneralizedRCNN(params)

    losses, detections = model.forward(imgs)
    for det in detections:
        jax.block_until_ready(det["boxes"])
        jax.block_until_ready(det["scores"])
        jax.block_until_ready(det["labels"])

    assert isinstance(losses, dict)
    assert len(detections) == 2
    assert detections[0]["boxes"].shape == (8, 4)
    assert detections[0]["scores"].shape == (8,)
    print("KERNEL_OK")
</pallas_src>

<mosaic_0001>
module attributes {stable_mosaic.version = 11 : i64} {
  func.func @_conv3x3_kernel(%arg0: i32, %arg1: i32, %arg2: memref<1x1x10x18x3xf32, #tpu.memory_space<vmem>>, %arg3: memref<9x3x16xf32, #tpu.memory_space<vmem>>, %arg4: memref<1x16xf32, #tpu.memory_space<vmem>>, %arg5: memref<1x1x128x16xbf16, #tpu.memory_space<vmem>>) attributes {dimension_semantics = [#tpu.dimension_semantics<parallel>, #tpu.dimension_semantics<parallel>], iteration_bounds = array<i64: 2, 2>, scalar_prefetch = 0 : i64, scratch_operands = 0 : i64, tpu.core_type = #tpu.core_type<tc>, window_params = [{transform_indices = @transform_0, window_bounds = array<i64: 1, 1, 10, 18, 3>}, {pipeline_mode = #tpu.pipeline_mode<synchronous>, transform_indices = @transform_1, window_bounds = array<i64: 9, 3, 16>}, {pipeline_mode = #tpu.pipeline_mode<synchronous>, transform_indices = @transform_2, window_bounds = array<i64: 1, 16>}, {transform_indices = @transform_3, window_bounds = array<i64: 1, 1, 128, 16>}]} {
    %cst = arith.constant 0.000000e+00 : f32
    %0 = vector.broadcast %cst : f32 to vector<128x16xf32>
    %c0 = arith.constant 0 : index
    %c0_0 = arith.constant 0 : index
    %c0_1 = arith.constant 0 : index
    %c0_2 = arith.constant 0 : index
    %c0_3 = arith.constant 0 : index
    %1 = vector.load %arg2[%c0, %c0_0, %c0_1, %c0_2, %c0_3] : memref<1x1x10x18x3xf32, #tpu.memory_space<vmem>>, vector<1x1x8x16x3xf32>
    %2 = vector.shape_cast %1 : vector<1x1x8x16x3xf32> to vector<8x16x3xf32>
    %3 = vector.shape_cast %2 : vector<8x16x3xf32> to vector<128x3xf32>
    %c0_4 = arith.constant 0 : index
    %c0_5 = arith.constant 0 : index
    %c0_6 = arith.constant 0 : index
    %4 = vector.load %arg3[%c0_4, %c0_5, %c0_6] : memref<9x3x16xf32, #tpu.memory_space<vmem>>, vector<1x3x16xf32>
    %5 = vector.shape_cast %4 : vector<1x3x16xf32> to vector<3x16xf32>
    %cst_7 = arith.constant dense<0.000000e+00> : vector<128x16xf32>
    %6 = tpu.matmul %3, %5, %cst_7 {dimension_numbers = #tpu.dot_dimension_numbers<[1], [0], [0], [1], [0, 0, 1, 1], [], []>} : vector<128x3xf32>, vector<3x16xf32>, vector<128x16xf32> -> vector<128x16xf32>
    %7 = arith.addf %0, %6 : vector<128x16xf32>
    %c0_8 = arith.constant 0 : index
    %c0_9 = arith.constant 0 : index
    %c0_10 = arith.constant 0 : index
    %c1 = arith.constant 1 : index
    %c0_11 = arith.constant 0 : index
    %8 = vector.load %arg2[%c0_8, %c0_9, %c0_10, %c1, %c0_11] : memref<1x1x10x18x3xf32, #tpu.memory_space<vmem>>, vector<1x1x8x16x3xf32>
    %9 = vector.shape_cast %8 : vector<1x1x8x16x3xf32> to vector<8x16x3xf32>
    %10 = vector.shape_cast %9 : vector<8x16x3xf32> to vector<128x3xf32>
    %c1_12 = arith.constant 1 : index
    %c0_13 = arith.constant 0 : index
    %c0_14 = arith.constant 0 : index
    %11 = vector.load %arg3[%c1_12, %c0_13, %c0_14] : memref<9x3x16xf32, #tpu.memory_space<vmem>>, vector<1x3x16xf32>
    %12 = vector.shape_cast %11 : vector<1x3x16xf32> to vector<3x16xf32>
    %cst_15 = arith.constant dense<0.000000e+00> : vector<128x16xf32>
    %13 = tpu.matmul %10, %12, %cst_15 {dimension_numbers = #tpu.dot_dimension_numbers<[1], [0], [0], [1], [0, 0, 1, 1], [], []>} : vector<128x3xf32>, vector<3x16xf32>, vector<128x16xf32> -> vector<128x16xf32>
    %14 = arith.addf %7, %13 : vector<128x16xf32>
    %c0_16 = arith.constant 0 : index
    %c0_17 = arith.constant 0 : index
    %c0_18 = arith.constant 0 : index
    %c2 = arith.constant 2 : index
    %c0_19 = arith.constant 0 : index
    %15 = vector.load %arg2[%c0_16, %c0_17, %c0_18, %c2, %c0_19] : memref<1x1x10x18x3xf32, #tpu.memory_space<vmem>>, vector<1x1x8x16x3xf32>
    %16 = vector.shape_cast %15 : vector<1x1x8x16x3xf32> to vector<8x16x3xf32>
    %17 = vector.shape_cast %16 : vector<8x16x3xf32> to vector<128x3xf32>
    %c2_20 = arith.constant 2 : index
    %c0_21 = arith.constant 0 : index
    %c0_22 = arith.constant 0 : index
    %18 = vector.load %arg3[%c2_20, %c0_21, %c0_22] : memref<9x3x16xf32, #tpu.memory_space<vmem>>, vector<1x3x16xf32>
    %19 = vector.shape_cast %18 : vector<1x3x16xf32> to vector<3x16xf32>
    %cst_23 = arith.constant dense<0.000000e+00> : vector<128x16xf32>
    %20 = tpu.matmul %17, %19, %cst_23 {dimension_numbers = #tpu.dot_dimension_numbers<[1], [0], [0], [1], [0, 0, 1, 1], [], []>} : vector<128x3xf32>, vector<3x16xf32>, vector<128x16xf32> -> vector<128x16xf32>
    %21 = arith.addf %14, %20 : vector<128x16xf32>
    %c0_24 = arith.constant 0 : index
    %c0_25 = arith.constant 0 : index
    %c1_26 = arith.constant 1 : index
    %c0_27 = arith.constant 0 : index
    %c0_28 = arith.constant 0 : index
    %22 = vector.load %arg2[%c0_24, %c0_25, %c1_26, %c0_27, %c0_28] : memref<1x1x10x18x3xf32, #tpu.memory_space<vmem>>, vector<1x1x8x16x3xf32>
    %23 = vector.shape_cast %22 : vector<1x1x8x16x3xf32> to vector<8x16x3xf32>
    %24 = vector.shape_cast %23 : vector<8x16x3xf32> to vector<128x3xf32>
    %c3 = arith.constant 3 : index
    %c0_29 = arith.constant 0 : index
    %c0_30 = arith.constant 0 : index
    %25 = vector.load %arg3[%c3, %c0_29, %c0_30] : memref<9x3x16xf32, #tpu.memory_space<vmem>>, vector<1x3x16xf32>
    %26 = vector.shape_cast %25 : vector<1x3x16xf32> to vector<3x16xf32>
    %cst_31 = arith.constant dense<0.000000e+00> : vector<128x16xf32>
    %27 = tpu.matmul %24, %26, %cst_31 {dimension_numbers = #tpu.dot_dimension_numbers<[1], [0], [0], [1], [0, 0, 1, 1], [], []>} : vector<128x3xf32>, vector<3x16xf32>, vector<128x16xf32> -> vector<128x16xf32>
    %28 = arith.addf %21, %27 : vector<128x16xf32>
    %c0_32 = arith.constant 0 : index
    %c0_33 = arith.constant 0 : index
    %c1_34 = arith.constant 1 : index
    %c1_35 = arith.constant 1 : index
    %c0_36 = arith.constant 0 : index
    %29 = vector.load %arg2[%c0_32, %c0_33, %c1_34, %c1_35, %c0_36] : memref<1x1x10x18x3xf32, #tpu.memory_space<vmem>>, vector<1x1x8x16x3xf32>
    %30 = vector.shape_cast %29 : vector<1x1x8x16x3xf32> to vector<8x16x3xf32>
    %31 = vector.shape_cast %30 : vector<8x16x3xf32> to vector<128x3xf32>
    %c4 = arith.constant 4 : index
    %c0_37 = arith.constant 0 : index
    %c0_38 = arith.constant 0 : index
    %32 = vector.load %arg3[%c4, %c0_37, %c0_38] : memref<9x3x16xf32, #tpu.memory_space<vmem>>, vector<1x3x16xf32>
    %33 = vector.shape_cast %32 : vector<1x3x16xf32> to vector<3x16xf32>
    %cst_39 = arith.constant dense<0.000000e+00> : vector<128x16xf32>
    %34 = tpu.matmul %31, %33, %cst_39 {dimension_numbers = #tpu.dot_dimension_numbers<[1], [0], [0], [1], [0, 0, 1, 1], [], []>} : vector<128x3xf32>, vector<3x16xf32>, vector<128x16xf32> -> vector<128x16xf32>
    %35 = arith.addf %28, %34 : vector<128x16xf32>
    %c0_40 = arith.constant 0 : index
    %c0_41 = arith.constant 0 : index
    %c1_42 = arith.constant 1 : index
    %c2_43 = arith.constant 2 : index
    %c0_44 = arith.constant 0 : index
    %36 = vector.load %arg2[%c0_40, %c0_41, %c1_42, %c2_43, %c0_44] : memref<1x1x10x18x3xf32, #tpu.memory_space<vmem>>, vector<1x1x8x16x3xf32>
    %37 = vector.shape_cast %36 : vector<1x1x8x16x3xf32> to vector<8x16x3xf32>
    %38 = vector.shape_cast %37 : vector<8x16x3xf32> to vector<128x3xf32>
    %c5 = arith.constant 5 : index
    %c0_45 = arith.constant 0 : index
    %c0_46 = arith.constant 0 : index
    %39 = vector.load %arg3[%c5, %c0_45, %c0_46] : memref<9x3x16xf32, #tpu.memory_space<vmem>>, vector<1x3x16xf32>
    %40 = vector.shape_cast %39 : vector<1x3x16xf32> to vector<3x16xf32>
    %cst_47 = arith.constant dense<0.000000e+00> : vector<128x16xf32>
    %41 = tpu.matmul %38, %40, %cst_47 {dimension_numbers = #tpu.dot_dimension_numbers<[1], [0], [0], [1], [0, 0, 1, 1], [], []>} : vector<128x3xf32>, vector<3x16xf32>, vector<128x16xf32> -> vector<128x16xf32>
    %42 = arith.addf %35, %41 : vector<128x16xf32>
    %c0_48 = arith.constant 0 : index
    %c0_49 = arith.constant 0 : index
    %c2_50 = arith.constant 2 : index
    %c0_51 = arith.constant 0 : index
    %c0_52 = arith.constant 0 : index
    %43 = vector.load %arg2[%c0_48, %c0_49, %c2_50, %c0_51, %c0_52] : memref<1x1x10x18x3xf32, #tpu.memory_space<vmem>>, vector<1x1x8x16x3xf32>
    %44 = vector.shape_cast %43 : vector<1x1x8x16x3xf32> to vector<8x16x3xf32>
    %45 = vector.shape_cast %44 : vector<8x16x3xf32> to vector<128x3xf32>
    %c6 = arith.constant 6 : index
    %c0_53 = arith.constant 0 : index
    %c0_54 = arith.constant 0 : index
    %46 = vector.load %arg3[%c6, %c0_53, %c0_54] : memref<9x3x16xf32, #tpu.memory_space<vmem>>, vector<1x3x16xf32>
    %47 = vector.shape_cast %46 : vector<1x3x16xf32> to vector<3x16xf32>
    %cst_55 = arith.constant dense<0.000000e+00> : vector<128x16xf32>
    %48 = tpu.matmul %45, %47, %cst_55 {dimension_numbers = #tpu.dot_dimension_numbers<[1], [0], [0], [1], [0, 0, 1, 1], [], []>} : vector<128x3xf32>, vector<3x16xf32>, vector<128x16xf32> -> vector<128x16xf32>
    %49 = arith.addf %42, %48 : vector<128x16xf32>
    %c0_56 = arith.constant 0 : index
    %c0_57 = arith.constant 0 : index
    %c2_58 = arith.constant 2 : index
    %c1_59 = arith.constant 1 : index
    %c0_60 = arith.constant 0 : index
    %50 = vector.load %arg2[%c0_56, %c0_57, %c2_58, %c1_59, %c0_60] : memref<1x1x10x18x3xf32, #tpu.memory_space<vmem>>, vector<1x1x8x16x3xf32>
    %51 = vector.shape_cast %50 : vector<1x1x8x16x3xf32> to vector<8x16x3xf32>
    %52 = vector.shape_cast %51 : vector<8x16x3xf32> to vector<128x3xf32>
    %c7 = arith.constant 7 : index
    %c0_61 = arith.constant 0 : index
    %c0_62 = arith.constant 0 : index
    %53 = vector.load %arg3[%c7, %c0_61, %c0_62] : memref<9x3x16xf32, #tpu.memory_space<vmem>>, vector<1x3x16xf32>
    %54 = vector.shape_cast %53 : vector<1x3x16xf32> to vector<3x16xf32>
    %cst_63 = arith.constant dense<0.000000e+00> : vector<128x16xf32>
    %55 = tpu.matmul %52, %54, %cst_63 {dimension_numbers = #tpu.dot_dimension_numbers<[1], [0], [0], [1], [0, 0, 1, 1], [], []>} : vector<128x3xf32>, vector<3x16xf32>, vector<128x16xf32> -> vector<128x16xf32>
    %56 = arith.addf %49, %55 : vector<128x16xf32>
    %c0_64 = arith.constant 0 : index
    %c0_65 = arith.constant 0 : index
    %c2_66 = arith.constant 2 : index
    %c2_67 = arith.constant 2 : index
    %c0_68 = arith.constant 0 : index
    %57 = vector.load %arg2[%c0_64, %c0_65, %c2_66, %c2_67, %c0_68] : memref<1x1x10x18x3xf32, #tpu.memory_space<vmem>>, vector<1x1x8x16x3xf32>
    %58 = vector.shape_cast %57 : vector<1x1x8x16x3xf32> to vector<8x16x3xf32>
    %59 = vector.shape_cast %58 : vector<8x16x3xf32> to vector<128x3xf32>
    %c8 = arith.constant 8 : index
    %c0_69 = arith.constant 0 : index
    %c0_70 = arith.constant 0 : index
    %60 = vector.load %arg3[%c8, %c0_69, %c0_70] : memref<9x3x16xf32, #tpu.memory_space<vmem>>, vector<1x3x16xf32>
    %61 = vector.shape_cast %60 : vector<1x3x16xf32> to vector<3x16xf32>
    %cst_71 = arith.constant dense<0.000000e+00> : vector<128x16xf32>
    %62 = tpu.matmul %59, %61, %cst_71 {dimension_numbers = #tpu.dot_dimension_numbers<[1], [0], [0], [1], [0, 0, 1, 1], [], []>} : vector<128x3xf32>, vector<3x16xf32>, vector<128x16xf32> -> vector<128x16xf32>
    %63 = arith.addf %56, %62 : vector<128x16xf32>
    %c0_72 = arith.constant 0 : index
    %c0_73 = arith.constant 0 : index
    %64 = vector.load %arg4[%c0_72, %c0_73] : memref<1x16xf32, #tpu.memory_space<vmem>>, vector<1x16xf32>
    %65 = vector.broadcast %64 : vector<1x16xf32> to vector<128x16xf32>
    %66 = arith.addf %63, %65 : vector<128x16xf32>
    %cst_74 = arith.constant 0.000000e+00 : f32
    %67 = vector.broadcast %cst_74 : f32 to vector<128x16xf32>
    %68 = arith.maximumf %66, %67 : vector<128x16xf32>
    %69 = arith.truncf %68 : vector<128x16xf32> to vector<128x16xbf16>
    %c0_75 = arith.constant 0 : index
    %c0_76 = arith.constant 0 : index
    %c0_77 = arith.constant 0 : index
    %c0_78 = arith.constant 0 : index
    %70 = vector.load %arg5[%c0_75, %c0_76, %c0_77, %c0_78] : memref<1x1x128x16xbf16, #tpu.memory_space<vmem>>, vector<1x1x128x16xbf16>
    %71 = vector.shape_cast %70 : vector<1x1x128x16xbf16> to vector<128x16xbf16>
    %72 = vector.shape_cast %69 : vector<128x16xbf16> to vector<1x1x128x16xbf16>
    tpu.vector_store %arg5[%c0_75, %c0_76, %c0_77, %c0_78], %72 {strides = array<i32>} : memref<1x1x128x16xbf16, #tpu.memory_space<vmem>>, vector<1x1x128x16xbf16>,
    return
  }
  func.func @transform_0(%arg0: i32, %arg1: i32) -> (i32, i32, i32, i32, i32) {
    %c0_i32 = arith.constant 0 : i32
    %c0_i32_0 = arith.constant 0 : i32
    %c0_i32_1 = arith.constant 0 : i32
    %c0_i32_2 = arith.constant 0 : i32
    return %arg0, %arg1, %c0_i32, %c0_i32_0, %c0_i32_1 : i32, i32, i32, i32, i32
  }
  func.func @transform_1(%arg0: i32, %arg1: i32) -> (i32, i32, i32) {
    %c0_i32 = arith.constant 0 : i32
    %c0_i32_0 = arith.constant 0 : i32
    %c0_i32_1 = arith.constant 0 : i32
    %c0_i32_2 = arith.constant 0 : i32
    return %c0_i32, %c0_i32_0, %c0_i32_1 : i32, i32, i32
  }
  func.func @transform_2(%arg0: i32, %arg1: i32) -> (i32, i32) {
    %c0_i32 = arith.constant 0 : i32
    %c0_i32_0 = arith.constant 0 : i32
    %c0_i32_1 = arith.constant 0 : i32
    return %c0_i32, %c0_i32_0 : i32, i32
  }
  func.func @transform_3(%arg0: i32, %arg1: i32) -> (i32, i32, i32, i32) {
    %c0_i32 = arith.constant 0 : i32
    %c0_i32_0 = arith.constant 0 : i32
    %c0_i32_1 = arith.constant 0 : i32
    return %arg0, %arg1, %c0_i32, %c0_i32_0 : i32, i32, i32, i32
  }
}

</mosaic_0001>

<llo_original>
// kernel: tpu_custom_call.1
$region0: #{tpu_custom_call.1}
  #allocation0 [shape = 'u32[]', space=smem, size = 0x4, offset = 0x4, fixed_abs, tag = 'smem constant byte address 0x4 - core index']
  #allocation1 [shape = 'u32[144,128]{1,0:T(1,128)}', space=vmem, size = 0x12000, scoped, tag = 'internal scratch']
  %s0 = inlined_call_operand.vmem [shape: f32[2,2,10,18,3], index: 0, kind: input, shape index: {}]
  %s1 = inlined_call_operand.vmem [shape: f32[9,3,16], index: 1, kind: input, shape index: {}]
  %s2 = inlined_call_operand.vmem [shape: f32[1,16], index: 2, kind: input, shape index: {}]
  %s3 = inlined_call_operand.vmem [shape: bf16[2,2,128,16], index: 3, kind: output, shape index: {}]
  %s4 = sld [smem:[#allocation0]]
  $region45: #{tpu_custom_call.1} parent=0
    _
  %s6 = ssub.s32 1, %s4
  %s7 = scalar_select 0, %s6, %s4
  loop: start=0, step=1, limit=6
  $region2: #{tpu_custom_call.1} parent=0 // loop_pre_header
    _
  $region3: #{tpu_custom_call.1} parent=0 // loop_header
    %s9 = sphi 0, %s13
    %p10 = scmp.ge.s32.totalorder %s9, 6
    %s16 = sphi 0, %s28
    %s17 = sphi 0, %s24
    %s18 = sphi 0, %s16
    %s19 = sphi 0, %s17
    %s20 = sphi 0, %s18
    %s21 = sphi 0, %s19
    %s33 = sphi 0, %s35
    %s36 = sphi 0, %s33
    %s37 = sphi 0, %s36
    %s53 = sphi 0, %s37
    %s57 = sphi 0, %s57
    %s59 = sphi 0, %s57
    %s60 = sphi 0, %s59
    %s74 = sphi 0, %s60
    %s78 = sphi 0, %s78
    %s80 = sphi 0, %s78
    %s81 = sphi 0, %s80
    %s95 = sphi 0, %s81
    %s103 = sphi 0, %s105
    %s106 = sphi 0, %s103
    %s107 = sphi 0, %s106
    %s123 = sphi 0, %s107
  $region4: #{tpu_custom_call.1} parent=0 // loop_header_branch
    %12 = sbr.rel (%p10) target = $region8
  $region5: #{tpu_custom_call.1} parent=0 // loop_body
    %s14 = ssub.s32 %s9, 1
    %s15 = ssub.s32 %s9, 2
    %s22 = sadd.s32 1, %s17
    %p23 = scmp.ge.s32.totalorder %s22, 2
    %s24 = scalar_select %p23, 0, %s22
    %s25 = sadd.s32 1, %s16
    %s26 = scalar_select %p23, %s25, %s16
    %p27 = scmp.ge.s32.totalorder %s26, 2
    %s28 = scalar_select %p27, 0, %s26
    %s29 = ssub.s32 %s16, %s28
    %s30 = ssub.s32 %s17, %s24
    %s31 = sor.u32 %s29, %s30
    %p32 = scmp.eq.s32.totalorder %s31, 0
    %s34 = sadd.s32 %s33, 1
    %s35 = scalar_select %p32, %s33, %s34
    %p38 = pneg %p32
    %p39 = scmp.eq.s32.totalorder %s9, 3
    %p40 = por %p38, %p39
    %p41 = scmp.ne.s32.totalorder %s33, %s36
    %p42 = scmp.eq.s32.totalorder %s9, 0
    %p43 = por %p41, %p42
    %p44 = scmp.ne.s32.totalorder %s33, %s36
    %p45 = scmp.eq.s32.totalorder %s14, 3
    %p46 = por %p44, %p45
    %p47 = scmp.ne.s32.totalorder %s36, %s37
    %p48 = scmp.eq.s32.totalorder %s14, 0
    %p49 = por %p47, %p48
    %p50 = scmp.ne.s32.totalorder %s36, %s37
    %p51 = scmp.eq.s32.totalorder %s15, 3
    %p52 = por %p50, %p51
    %p54 = scmp.ne.s32.totalorder %s37, %s53
    %p55 = scmp.eq.s32.totalorder %s15, 0
    %p56 = por %p54, %p55
    %s58 = sadd.s32 %s57, 1
    %p61 = scmp.eq.s32.totalorder %s9, 3
    %p62 = scmp.ne.s32.totalorder %s57, %s59
    %p63 = scmp.eq.s32.totalorder %s9, 0
    %p64 = por %p62, %p63
    %p65 = scmp.ne.s32.totalorder %s57, %s59
    %p66 = scmp.eq.s32.totalorder %s14, 3
    %p67 = por %p65, %p66
    %p68 = scmp.ne.s32.totalorder %s59, %s60
    %p69 = scmp.eq.s32.totalorder %s14, 0
    %p70 = por %p68, %p69
    %p71 = scmp.ne.s32.totalorder %s59, %s60
    %p72 = scmp.eq.s32.totalorder %s15, 3
    %p73 = por %p71, %p72
    %p75 = scmp.ne.s32.totalorder %s60, %s74
    %p76 = scmp.eq.s32.totalorder %s15, 0
    %p77 = por %p75, %p76
    %s79 = sadd.s32 %s78, 1
    %p82 = scmp.eq.s32.totalorder %s9, 3
    %p83 = scmp.ne.s32.totalorder %s78, %s80
    %p84 = scmp.eq.s32.totalorder %s9, 0
    %p85 = por %p83, %p84
    %p86 = scmp.ne.s32.totalorder %s78, %s80
    %p87 = scmp.eq.s32.totalorder %s14, 3
    %p88 = por %p86, %p87
    %p89 = scmp.ne.s32.totalorder %s80, %s81
    %p90 = scmp.eq.s32.totalorder %s14, 0
    %p91 = por %p89, %p90
    %p92 = scmp.ne.s32.totalorder %s80, %s81
    %p93 = scmp.eq.s32.totalorder %s15, 3
    %p94 = por %p92, %p93
    %p96 = scmp.ne.s32.totalorder %s81, %s95
    %p97 = scmp.eq.s32.totalorder %s15, 0
    %p98 = por %p96, %p97
    %s99 = ssub.s32 %s16, %s28
    %s100 = ssub.s32 %s17, %s24
    %s101 = sor.u32 %s99, %s100
    %p102 = scmp.eq.s32.totalorder %s101, 0
    %s104 = sadd.s32 %s103, 1
    %s105 = scalar_select %p102, %s103, %s104
    %p108 = pneg %p102
    %p109 = scmp.eq.s32.totalorder %s9, 3
    %p110 = por %p108, %p109
    %p111 = scmp.ne.s32.totalorder %s103, %s106
    %p112 = scmp.eq.s32.totalorder %s9, 0
    %p113 = por %p111, %p112
    %p114 = scmp.ne.s32.totalorder %s103, %s106
    %p115 = scmp.eq.s32.totalorder %s14, 3
    %p116 = por %p114, %p115
    %p117 = scmp.ne.s32.totalorder %s106, %s107
    %p118 = scmp.eq.s32.totalorder %s14, 0
    %p119 = por %p117, %p118
    %p120 = scmp.ne.s32.totalorder %s106, %s107
    %p121 = scmp.eq.s32.totalorder %s15, 3
    %p122 = por %p120, %p121
    %p124 = scmp.ne.s32.totalorder %s107, %s123
    %p125 = scmp.eq.s32.totalorder %s15, 0
    %p126 = por %p124, %p125
    %p127 = scmp.le.s32.totalorder 1, %s9
    %p128 = scmp.lt.s32.totalorder %s9, 5
    %p129 = pnand %p127, %p128
    %p130 = pneg %p129
    // Predicated region
    $region9: #{tpu_custom_call.1} parent=5 // pred_check
      _
    $region10: #{tpu_custom_call.1} parent=5 // pred_check_branch
      %132 = sbr.rel (%p129) target = $region12
    $region11: #{tpu_custom_call.1} parent=5 // pred_region
      %s133 = ssub.s32 %s9, 1
      // Predicated region
      $region13: #{tpu_custom_call.1} parent=11 // pred_check
        %p134 = pneg %p70
      $region14: #{tpu_custom_call.1} parent=11 // pred_check_branch
        %136 = sbr.rel (%p134) target = $region16
      $region15: #{tpu_custom_call.1} parent=11 // pred_region
        _
      $region16: #{tpu_custom_call.1} parent=11 // pred_fallthru
        _
      // Predicated region
      $region17: #{tpu_custom_call.1} parent=11 // pred_check
        %p137 = pneg %p91
      $region18: #{tpu_custom_call.1} parent=11 // pred_check_branch
        %139 = sbr.rel (%p137) target = $region20
      $region19: #{tpu_custom_call.1} parent=11 // pred_region
        _
      $region20: #{tpu_custom_call.1} parent=11 // pred_fallthru
        _
    $region12: #{tpu_custom_call.1} parent=5 // pred_fallthru
      _
    %p140 = scmp.lt.s32.totalorder %s9, 4
    // Predicated region
    $region21: #{tpu_custom_call.1} parent=5 // pred_check
      %p141 = pneg %p140
    $region22: #{tpu_custom_call.1} parent=5 // pred_check_branch
      %143 = sbr.rel (%p141) target = $region24
    $region23: #{tpu_custom_call.1} parent=5 // pred_region
      // Predicated region
      $region25: #{tpu_custom_call.1} parent=23 // pred_check
        %p144 = pneg %p43
      $region26: #{tpu_custom_call.1} parent=23 // pred_check_branch
        %146 = sbr.rel (%p144) target = $region28
      $region27: #{tpu_custom_call.1} parent=23 // pred_region
        %p147 = scmp.lt.s32.totalorder %s16, 1
        %s148 = scalar_select %p147, %s16, 1
        %p149 = scmp.lt.s32.totalorder %s17, 1
        %s150 = scalar_select %p149, %s17, 1
        %s151 = smul.addr %s150, 30
        %s152 = smul.addr %s148, 60
        %s153 = sadd.s32 %s151, %s152
        %s154 = smul.addr %s153, 8
        %s155 = scalar_lea.vmem %s0, %s154
      $region28: #{tpu_custom_call.1} parent=23 // pred_fallthru
        _
    $region24: #{tpu_custom_call.1} parent=5 // pred_fallthru
      _
    %p156 = scmp.le.s32.totalorder 1, %s9
    %p157 = scmp.lt.s32.totalorder %s9, 5
    %p158 = pnand %p156, %p157
    %p159 = pneg %p158
    // Predicated region
    $region29: #{tpu_custom_call.1} parent=5 // pred_check
      _
    $region30: #{tpu_custom_call.1} parent=5 // pred_check_branch
      %161 = sbr.rel (%p158) target = $region32
    $region31: #{tpu_custom_call.1} parent=5 // pred_region
      %s162 = ssub.s32 %s9, 1
      %p163 = scmp.lt.s32.totalorder %s18, 1
      %s164 = scalar_select %p163, %s18, 1
      %p165 = scmp.lt.s32.totalorder %s19, 1
      %s166 = scalar_select %p165, %s19, 1
      %s167 = smul.addr %s166, 30
      %s168 = smul.addr %s164, 60
      %s169 = sadd.s32 %s167, %s168
      %s170 = smul.addr %s169, 8
      %s171 = scalar_lea.vmem %s0, %s170
      %p172 = pneg %p49
      %p173 = pneg %p46
      %p174 = pneg %p70
      %p175 = pneg %p67
      %p176 = pneg %p91
      %p177 = pneg %p88
      %p178 = pneg %p119
      %p179 = pneg %p116
      %p180 = scmp.lt.s32.totalorder %s18, 1
      %s181 = scalar_select %p180, %s18, 1
      %p182 = scmp.lt.s32.totalorder %s19, 1
      %s183 = scalar_select %p182, %s19, 1
      %s184 = smul.addr %s183, 16
      %s185 = smul.addr %s181, 32
      %s186 = sadd.s32 %s184, %s185
      %s187 = smul.addr %s186, 4
      %s188 = scalar_lea.vmem %s3, %s187
      %p189 = scmp.lt.s32.totalorder %s18, 1
      %s190 = scalar_select %p189, %s18, 1
      %p191 = scmp.lt.s32.totalorder %s19, 1
      %s192 = scalar_select %p191, %s19, 1
      %s193 = smul.addr %s192, 30
      %s194 = smul.addr %s190, 60
      %s195 = sadd.s32 %s193, %s194
      %s196 = smul.addr %s195, 8
      %s197 = scalar_lea.vmem %s0, %s196
      %p198 = scmp.lt.s32.totalorder %s18, 1
      %s199 = scalar_select %p198, %s18, 1
      %p200 = scmp.lt.s32.totalorder %s19, 1
      %s201 = scalar_select %p200, %s19, 1
      %s202 = smul.addr %s201, 16
      %s203 = smul.addr %s199, 32
      %s204 = sadd.s32 %s202, %s203
      %s205 = smul.addr %s204, 4
      %s206 = scalar_lea.vmem %s3, %s205
      %v207 = vld [vmem:[%s197] sm:$0xff]
      %v208 = vld [vmem:[%s197 + $0x8] sm:$0xff]
      %v209 = vld [vmem:[%s197 + $0x18] sm:$0xff]
      %v210 = vld [vmem:[%s197 + $0x20] sm:$0xff]
      %v211 = vld [vmem:[%s197 + $0x30] sm:$0xff]
      %v212 = vld [vmem:[%s197 + $0x38] sm:$0xff]
      %v213 = vld [vmem:[%s197 + $0x48] sm:$0xff]
      %v214 = vld [vmem:[%s197 + $0x50] sm:$0xff]
      %v215 = vld [vmem:[%s197 + $0x60] sm:$0xff]
      %v216 = vld [vmem:[%s197 + $0x68] sm:$0xff]
      %v217 = vld [vmem:[%s197 + $0x78] sm:$0xff]
      %v218 = vld [vmem:[%s197 + $0x80] sm:$0xff]
      %v219 = vld [vmem:[%s197 + $0x90] sm:$0xff]
      %v220 = vld [vmem:[%s197 + $0x98] sm:$0xff]
      %v221 = vld [vmem:[%s197 + $0xa8] sm:$0xff]
      %v222 = vld [vmem:[%s197 + $0xb0] sm:$0xff]
      %v223 = vld [vmem:[%s1] sm:$0x7]
      %v224 = vld [vmem:[%s197 + $0x1] sm:$0xff]
      %v225 = vld [vmem:[%s197 + $0x9] sm:$0xff]
      %v226 = vld [vmem:[%s197 + $0x19] sm:$0xff]
      %v227 = vld [vmem:[%s197 + $0x21] sm:$0xff]
      %v228 = vld [vmem:[%s197 + $0x31] sm:$0xff]
      %v229 = vld [vmem:[%s197 + $0x39] sm:$0xff]
      %v230 = vld [vmem:[%s197 + $0x49] sm:$0xff]
      %v231 = vld [vmem:[%s197 + $0x51] sm:$0xff]
      %v232 = vld [vmem:[%s197 + $0x61] sm:$0xff]
      %v233 = vld [vmem:[%s197 + $0x69] sm:$0xff]
      %v234 = vld [vmem:[%s197 + $0x79] sm:$0xff]
      %v235 = vld [vmem:[%s197 + $0x81] sm:$0xff]
      %v236 = vld [vmem:[%s197 + $0x91] sm:$0xff]
      %v237 = vld [vmem:[%s197 + $0x99] sm:$0xff]
      %v238 = vld [vmem:[%s197 + $0xa9] sm:$0xff]
      %v239 = vld [vmem:[%s197 + $0xb1] sm:$0xff]
      %s240 = scalar_lea.vmem %s1, 4
      %v241 = vld [vmem:[%s240] sm:$0x7]
      %vm242 = vcmask 23552
      %v244 = vsel %vm242, %v224, 0
      %v247 = vsel %vm242, %v225, 0
      %v250 = vsel %vm242, %v226, 0
      %v253 = vsel %vm242, %v227, 0
      %v256 = vsel %vm242, %v228, 0
      %v259 = vsel %vm242, %v229, 0
      %v262 = vsel %vm242, %v230, 0
      %v265 = vsel %vm242, %v231, 0
      %v268 = vsel %vm242, %v232, 0
      %v271 = vsel %vm242, %v233, 0
      %v274 = vsel %vm242, %v234, 0
      %v277 = vsel %vm242, %v235, 0
      %v280 = vsel %vm242, %v236, 0
      %v283 = vsel %vm242, %v237, 0
      %v286 = vsel %vm242, %v238, 0
      %v289 = vsel %vm242, %v239, 0
      %vm291 = vcmask 1042432
      %v293 = vsel %vm291, %v241, 0
      %295 = vmatprep.subr.mxu0 0.0
      %296 = vmatpush1.msra.mxu0 0.0
      %297 = vmatprep.subr.mxu0 0.0
      %298 = vmatpush1.msra.mxu0 0.0
      %299 = vmatprep.subr.mxu0 0.0
      %300 = vmatpush1.msra.mxu0 0.0
      %301 = vmatprep.subr.mxu0 0.0
      %302 = vmatpush1.msra.mxu0 0.0
      %303 = vmatprep.subr.mxu0 0.0
      %304 = vmatpush1.msra.mxu0 0.0
      %305 = vmatprep.subr.mxu0 0.0
      %306 = vmatpush1.msra.mxu0 0.0
      %307 = vmatprep.subr.mxu0 0.0
      %308 = vmatpush1.msra.mxu0 0.0
      %309 = vmatprep.subr.mxu0 0.0
      %310 = vmatpush1.msra.mxu0 0.0
      %311 = vmatprep.subr.mxu0 0.0
      %312 = vmatpush1.msra.mxu0 0.0
      %313 = vmatprep.subr.mxu0 0.0
      %314 = vmatpush1.msra.mxu0 0.0
      %315 = vmatprep.subr.mxu0 0.0
      %316 = vmatpush1.msra.mxu0 0.0
      %317 = vmatprep.subr.mxu0 0.0
      %318 = vmatpush1.msra.mxu0 0.0
      %319 = vmatprep.subr.mxu0 0.0
      %320 = vmatpush1.msra.mxu0 0.0
      %321 = vmatprep.subr.mxu0 0.0
      %322 = vmatpush1.msra.mxu0 0.0
      %323 = vmatprep.subr.mxu0 0.0
      %324 = vmatpush1.msra.mxu0 0.0
      %325 = vmatprep.subr.mxu0 0.0
      %326 = vmatpush1.msra.mxu0 %v293
      %327 = vmatprep.subr.mxu0 0.0
      %328 = vmatpush2.msra.mxu0 0.0
      %329 = vmatprep.subr.mxu0 0.0
      %330 = vmatpush2.msra.mxu0 0.0
      %331 = vmatprep.subr.mxu0 0.0
      %332 = vmatpush2.msra.mxu0 0.0
      %333 = vmatprep.subr.mxu0 0.0
      %334 = vmatpush2.msra.mxu0 0.0
      %335 = vmatprep.subr.mxu0 0.0
      %336 = vmatpush2.msra.mxu0 0.0
      %337 = vmatprep.subr.mxu0 0.0
      %338 = vmatpush2.msra.mxu0 0.0
      %339 = vmatprep.subr.mxu0 0.0
      %340 = vmatpush2.msra.mxu0 0.0
      %341 = vmatprep.subr.mxu0 0.0
      %342 = vmatpush2.msra.mxu0 0.0
      %343 = vmatprep.subr.mxu0 0.0
      %344 = vmatpush2.msra.mxu0 0.0
      %345 = vmatprep.subr.mxu0 0.0
      %346 = vmatpush2.msra.mxu0 0.0
      %347 = vmatprep.subr.mxu0 0.0
      %348 = vmatpush2.msra.mxu0 0.0
      %349 = vmatprep.subr.mxu0 0.0
      %350 = vmatpush2.msra.mxu0 0.0
      %351 = vmatprep.subr.mxu0 0.0
      %352 = vmatpush2.msra.mxu0 0.0
      %353 = vmatprep.subr.mxu0 0.0
      %354 = vmatpush2.msra.mxu0 0.0
      %355 = vmatprep.subr.mxu0 0.0
      %356 = vmatpush2.msra.mxu0 0.0
      %357 = vmatprep.subr.mxu0 0.0
      %358 = vmatpush2.msra.mxu0 0.0
      %359 = vmatprep.mubr.f32.mxu0 0.0
      %360 = vmatmul.mubr.f32.gmra.mxu0 %v244
      %v361 = vpop.f32.mrf.mxu0
      %v362 = vadd.f32 0.0, %v361
      %v363 = vpop.f32.mrf.mxu0
      %364 = vmatprep.mubr.f32.mxu0 0.0
      %365 = vmatmul.mubr.f32.gmra.mxu0 %v247
      %v366 = vpop.f32.mrf.mxu0
      %v367 = vadd.f32 0.0, %v366
      %v368 = vpop.f32.mrf.mxu0
      %369 = vmatprep.mubr.f32.mxu0 0.0
      %370 = vmatmul.mubr.f32.gmra.mxu0 %v250
      %v371 = vpop.f32.mrf.mxu0
      %v372 = vadd.f32 0.0, %v371
      %v373 = vpop.f32.mrf.mxu0
      %374 = vmatprep.mubr.f32.mxu0 0.0
      %375 = vmatmul.mubr.f32.gmra.mxu0 %v253
      %v376 = vpop.f32.mrf.mxu0
      %v377 = vadd.f32 0.0, %v376
      %v378 = vpop.f32.mrf.mxu0
      %379 = vmatprep.mubr.f32.mxu0 0.0
      %380 = vmatmul.mubr.f32.gmra.mxu0 %v256
      %v381 = vpop.f32.mrf.mxu0
      %v382 = vadd.f32 0.0, %v381
      %v383 = vpop.f32.mrf.mxu0
      %384 = vmatprep.mubr.f32.mxu0 0.0
      %385 = vmatmul.mubr.f32.gmra.mxu0 %v259
      %v386 = vpop.f32.mrf.mxu0
      %v387 = vadd.f32 0.0, %v386
      %v388 = vpop.f32.mrf.mxu0
      %389 = vmatprep.mubr.f32.mxu0 0.0
      %390 = vmatmul.mubr.f32.gmra.mxu0 %v262
      %v391 = vpop.f32.mrf.mxu0
      %v392 = vadd.f32 0.0, %v391
      %v393 = vpop.f32.mrf.mxu0
      %394 = vmatprep.mubr.f32.mxu0 0.0
      %395 = vmatmul.mubr.f32.gmra.mxu0 %v265
      %v396 = vpop.f32.mrf.mxu0
      %v397 = vadd.f32 0.0, %v396
      %v398 = vpop.f32.mrf.mxu0
      %399 = vmatprep.mubr.f32.mxu0 0.0
      %400 = vmatmul.mubr.f32.gmra.mxu0 %v268
      %v401 = vpop.f32.mrf.mxu0
      %v402 = vadd.f32 0.0, %v401
      %v403 = vpop.f32.mrf.mxu0
      %404 = vmatprep.mubr.f32.mxu0 0.0
      %405 = vmatmul.mubr.f32.gmra.mxu0 %v271
      %v406 = vpop.f32.mrf.mxu0
      %v407 = vadd.f32 0.0, %v406
      %v408 = vpop.f32.mrf.mxu0
      %409 = vmatprep.mubr.f32.mxu0 0.0
      %410 = vmatmul.mubr.f32.gmra.mxu0 %v274
      %v411 = vpop.f32.mrf.mxu0
      %v412 = vadd.f32 0.0, %v411
      %v413 = vpop.f32.mrf.mxu0
      %414 = vmatprep.mubr.f32.mxu0 0.0
      %415 = vmatmul.mubr.f32.gmra.mxu0 %v277
      %v416 = vpop.f32.mrf.mxu0
      %v417 = vadd.f32 0.0, %v416
      %v418 = vpop.f32.mrf.mxu0
      %419 = vmatprep.mubr.f32.mxu0 0.0
      %420 = vmatmul.mubr.f32.gmra.mxu0 %v280
      %v421 = vpop.f32.mrf.mxu0
      %v422 = vadd.f32 0.0, %v421
      %v423 = vpop.f32.mrf.mxu0
      %424 = vmatprep.mubr.f32.mxu0 0.0
      %425 = vmatmul.mubr.f32.gmra.mxu0 %v283
      %v426 = vpop.f32.mrf.mxu0
      %v427 = vadd.f32 0.0, %v426
      %v428 = vpop.f32.mrf.mxu0
      %429 = vmatprep.mubr.f32.mxu0 0.0
      %430 = vmatmul.mubr.f32.gmra.mxu0 %v286
      %v431 = vpop.f32.mrf.mxu0
      %v432 = vadd.f32 0.0, %v431
      %v433 = vpop.f32.mrf.mxu0
      %434 = vmatprep.mubr.f32.mxu0 0.0
      %435 = vmatmul.mubr.f32.gmra.mxu0 %v289
      %v436 = vpop.f32.mrf.mxu0
      %v437 = vadd.f32 0.0, %v436
      %v438 = vpop.f32.mrf.mxu0
      %439 = vdwg.mxu0
      %v441 = vsel %vm242, %v207, 0
      %v444 = vsel %vm242, %v208, 0
      %v447 = vsel %vm242, %v209, 0
      %v450 = vsel %vm242, %v210, 0
      %v453 = vsel %vm242, %v211, 0
      %v456 = vsel %vm242, %v212, 0
      %v459 = vsel %vm242, %v213, 0
      %v462 = vsel %vm242, %v214, 0
      %v465 = vsel %vm242, %v215, 0
      %v468 = vsel %vm242, %v216, 0
      %v471 = vsel %vm242, %v217, 0
      %v474 = vsel %vm242, %v218, 0
      %v477 = vsel %vm242, %v219, 0
      %v480 = vsel %vm242, %v220, 0
      %v483 = vsel %vm242, %v221, 0
      %v486 = vsel %vm242, %v222, 0
      %v489 = vsel %vm291, %v223, 0
      %491 = vmatprep.subr.mxu0 0.0
      %492 = vmatpush1.msra.mxu0 0.0
      %493 = vmatprep.subr.mxu0 0.0
      %494 = vmatpush1.msra.mxu0 0.0
      %495 = vmatprep.subr.mxu0 0.0
      %496 = vmatpush1.msra.mxu0 0.0
      %497 = vmatprep.subr.mxu0 0.0
      %498 = vmatpush1.msra.mxu0 0.0
      %499 = vmatprep.subr.mxu0 0.0
      %500 = vmatpush1.msra.mxu0 0.0
      %501 = vmatprep.subr.mxu0 0.0
      %502 = vmatpush1.msra.mxu0 0.0
      %503 = vmatprep.subr.mxu0 0.0
      %504 = vmatpush1.msra.mxu0 0.0
      %505 = vmatprep.subr.mxu0 0.0
      %506 = vmatpush1.msra.mxu0 0.0
      %507 = vmatprep.subr.mxu0 0.0
      %508 = vmatpush1.msra.mxu0 0.0
      %509 = vmatprep.subr.mxu0 0.0
      %510 = vmatpush1.msra.mxu0 0.0
      %511 = vmatprep.subr.mxu0 0.0
      %512 = vmatpush1.msra.mxu0 0.0
      %513 = vmatprep.subr.mxu0 0.0
      %514 = vmatpush1.msra.mxu0 0.0
      %515 = vmatprep.subr.mxu0 0.0
      %516 = vmatpush1.msra.mxu0 0.0
      %517 = vmatprep.subr.mxu0 0.0
      %518 = vmatpush1.msra.mxu0 0.0
      %519 = vmatprep.subr.mxu0 0.0
      %520 = vmatpush1.msra.mxu0 0.0
      %521 = vmatprep.subr.mxu0 0.0
      %522 = vmatpush1.msra.mxu0 %v489
      %523 = vmatprep.subr.mxu0 0.0
      %524 = vmatpush2.msra.mxu0 0.0
      %525 = vmatprep.subr.mxu0 0.0
      %526 = vmatpush2.msra.mxu0 0.0
      %527 = vmatprep.subr.mxu0 0.0
      %528 = vmatpush2.msra.mxu0 0.0
      %529 = vmatprep.subr.mxu0 0.0
      %530 = vmatpush2.msra.mxu0 0.0
      %531 = vmatprep.subr.mxu0 0.0
      %532 = vmatpush2.msra.mxu0 0.0
      %533 = vmatprep.subr.mxu0 0.0
      %534 = vmatpush2.msra.mxu0 0.0
      %535 = vmatprep.subr.mxu0 0.0
      %536 = vmatpush2.msra.mxu0 0.0
      %537 = vmatprep.subr.mxu0 0.0
      %538 = vmatpush2.msra.mxu0 0.0
      %539 = vmatprep.subr.mxu0 0.0
      %540 = vmatpush2.msra.mxu0 0.0
      %541 = vmatprep.subr.mxu0 0.0
      %542 = vmatpush2.msra.mxu0 0.0
      %543 = vmatprep.subr.mxu0 0.0
      %544 = vmatpush2.msra.mxu0 0.0
      %545 = vmatprep.subr.mxu0 0.0
      %546 = vmatpush2.msra.mxu0 0.0
      %547 = vmatprep.subr.mxu0 0.0
      %548 = vmatpush2.msra.mxu0 0.0
      %549 = vmatprep.subr.mxu0 0.0
      %550 = vmatpush2.msra.mxu0 0.0
      %551 = vmatprep.subr.mxu0 0.0
      %552 = vmatpush2.msra.mxu0 0.0
      %553 = vmatprep.subr.mxu0 0.0
      %554 = vmatpush2.msra.mxu0 0.0
      %555 = vmatprep.mubr.f32.mxu0 0.0
      %556 = vmatmul.mubr.f32.gmra.mxu0 %v441
      %v557 = vpop.f32.mrf.mxu0
      %v558 = vadd.f32 %v362, %v557
      %v559 = vpop.f32.mrf.mxu0
      %560 = vmatprep.mubr.f32.mxu0 0.0
      %561 = vmatmul.mubr.f32.gmra.mxu0 %v444
      %v562 = vpop.f32.mrf.mxu0
      %v563 = vadd.f32 %v367, %v562
      %v564 = vpop.f32.mrf.mxu0
      %565 = vmatprep.mubr.f32.mxu0 0.0
      %566 = vmatmul.mubr.f32.gmra.mxu0 %v447
      %v567 = vpop.f32.mrf.mxu0
      %v568 = vadd.f32 %v372, %v567
      %v569 = vpop.f32.mrf.mxu0
      %570 = vmatprep.mubr.f32.mxu0 0.0
      %571 = vmatmul.mubr.f32.gmra.mxu0 %v450
      %v572 = vpop.f32.mrf.mxu0
      %v573 = vadd.f32 %v377, %v572
      %v574 = vpop.f32.mrf.mxu0
      %575 = vmatprep.mubr.f32.mxu0 0.0
      %576 = vmatmul.mubr.f32.gmra.mxu0 %v453
      %v577 = vpop.f32.mrf.mxu0
      %v578 = vadd.f32 %v382, %v577
      %v579 = vpop.f32.mrf.mxu0
      %580 = vmatprep.mubr.f32.mxu0 0.0
      %581 = vmatmul.mubr.f32.gmra.mxu0 %v456
      %v582 = vpop.f32.mrf.mxu0
      %v583 = vadd.f32 %v387, %v582
      %v584 = vpop.f32.mrf.mxu0
      %585 = vmatprep.mubr.f32.mxu0 0.0
      %586 = vmatmul.mubr.f32.gmra.mxu0 %v459
      %v587 = vpop.f32.mrf.mxu0
      %v588 = vadd.f32 %v392, %v587
      %v589 = vpop.f32.mrf.mxu0
      %590 = vmatprep.mubr.f32.mxu0 0.0
      %591 = vmatmul.mubr.f32.gmra.mxu0 %v462
      %v592 = vpop.f32.mrf.mxu0
      %v593 = vadd.f32 %v397, %v592
      %v594 = vpop.f32.mrf.mxu0
      %595 = vmatprep.mubr.f32.mxu0 0.0
      %596 = vmatmul.mubr.f32.gmra.mxu0 %v465
      %v597 = vpop.f32.mrf.mxu0
      %v598 = vadd.f32 %v402, %v597
      %v599 = vpop.f32.mrf.mxu0
      %600 = vmatprep.mubr.f32.mxu0 0.0
      %601 = vmatmul.mubr.f32.gmra.mxu0 %v468
      %v602 = vpop.f32.mrf.mxu0
      %v603 = vadd.f32 %v407, %v602
      %v604 = vpop.f32.mrf.mxu0
      %605 = vmatprep.mubr.f32.mxu0 0.0
      %606 = vmatmul.mubr.f32.gmra.mxu0 %v471
      %v607 = vpop.f32.mrf.mxu0
      %v608 = vadd.f32 %v412, %v607
      %v609 = vpop.f32.mrf.mxu0
      %610 = vmatprep.mubr.f32.mxu0 0.0
      %611 = vmatmul.mubr.f32.gmra.mxu0 %v474
      %v612 = vpop.f32.mrf.mxu0
      %v613 = vadd.f32 %v417, %v612
      %v614 = vpop.f32.mrf.mxu0
      %615 = vmatprep.mubr.f32.mxu0 0.0
      %616 = vmatmul.mubr.f32.gmra.mxu0 %v477
      %v617 = vpop.f32.mrf.mxu0
      %v618 = vadd.f32 %v422, %v617
      %v619 = vpop.f32.mrf.mxu0
      %620 = vmatprep.mubr.f32.mxu0 0.0
      %621 = vmatmul.mubr.f32.gmra.mxu0 %v480
      %v622 = vpop.f32.mrf.mxu0
      %v623 = vadd.f32 %v427, %v622
      %v624 = vpop.f32.mrf.mxu0
      %625 = vmatprep.mubr.f32.mxu0 0.0
      %626 = vmatmul.mubr.f32.gmra.mxu0 %v483
      %v627 = vpop.f32.mrf.mxu0
      %v628 = vadd.f32 %v432, %v627
      %v629 = vpop.f32.mrf.mxu0
      %630 = vmatprep.mubr.f32.mxu0 0.0
      %631 = vmatmul.mubr.f32.gmra.mxu0 %v486
      %v632 = vpop.f32.mrf.mxu0
      %v633 = vadd.f32 %v437, %v632
      %v634 = vpop.f32.mrf.mxu0
      %635 = vdwg.mxu0
      %v636 = vld [vmem:[%s197 + $0x2] sm:$0xff]
      %v637 = vld [vmem:[%s197 + $0xa] sm:$0xff]
      %v638 = vld [vmem:[%s197 + $0x1a] sm:$0xff]
      %v639 = vld [vmem:[%s197 + $0x22] sm:$0xff]
      %v640 = vld [vmem:[%s197 + $0x32] sm:$0xff]
      %v641 = vld [vmem:[%s197 + $0x3a] sm:$0xff]
      %v642 = vld [vmem:[%s197 + $0x4a] sm:$0xff]
      %v643 = vld [vmem:[%s197 + $0x52] sm:$0xff]
      %v644 = vld [vmem:[%s197 + $0x62] sm:$0xff]
      %v645 = vld [vmem:[%s197 + $0x6a] sm:$0xff]
      %v646 = vld [vmem:[%s197 + $0x7a] sm:$0xff]
      %v647 = vld [vmem:[%s197 + $0x82] sm:$0xff]
      %v648 = vld [vmem:[%s197 + $0x92] sm:$0xff]
      %v649 = vld [vmem:[%s197 + $0x9a] sm:$0xff]
      %v650 = vld [vmem:[%s197 + $0xaa] sm:$0xff]
      %v651 = vld [vmem:[%s197 + $0xb2] sm:$0xff]
      %s652 = scalar_lea.vmem %s1, 8
      %v653 = vld [vmem:[%s652] sm:$0x7]
      %v655 = vsel %vm242, %v636, 0
      %v658 = vsel %vm242, %v637, 0
      %v661 = vsel %vm242, %v638, 0
      %v664 = vsel %vm242, %v639, 0
      %v667 = vsel %vm242, %v640, 0
      %v670 = vsel %vm242, %v641, 0
      %v673 = vsel %vm242, %v642, 0
      %v676 = vsel %vm242, %v643, 0
      %v679 = vsel %vm242, %v644, 0
      %v682 = vsel %vm242, %v645, 0
      %v685 = vsel %vm242, %v646, 0
      %v688 = vsel %vm242, %v647, 0
      %v691 = vsel %vm242, %v648, 0
      %v694 = vsel %vm242, %v649, 0
      %v697 = vsel %vm242, %v650, 0
      %v700 = vsel %vm242, %v651, 0
      %v703 = vsel %vm291, %v653, 0
      %705 = vmatprep.subr.mxu0 0.0
      %706 = vmatpush1.msra.mxu0 0.0
      %707 = vmatprep.subr.mxu0 0.0
      %708 = vmatpush1.msra.mxu0 0.0
      %709 = vmatprep.subr.mxu0 0.0
      %710 = vmatpush1.msra.mxu0 0.0
      %711 = vmatprep.subr.mxu0 0.0
      %712 = vmatpush1.msra.mxu0 0.0
      %713 = vmatprep.subr.mxu0 0.0
      %714 = vmatpush1.msra.mxu0 0.0
      %715 = vmatprep.subr.mxu0 0.0
      %716 = vmatpush1.msra.mxu0 0.0
      %717 = vmatprep.subr.mxu0 0.0
      %718 = vmatpush1.msra.mxu0 0.0
      %719 = vmatprep.subr.mxu0 0.0
      %720 = vmatpush1.msra.mxu0 0.0
      %721 = vmatprep.subr.mxu0 0.0
      %722 = vmatpush1.msra.mxu0 0.0
      %723 = vmatprep.subr.mxu0 0.0
      %724 = vmatpush1.msra.mxu0 0.0
      %725 = vmatprep.subr.mxu0 0.0
      %726 = vmatpush1.msra.mxu0 0.0
      %727 = vmatprep.subr.mxu0 0.0
      %728 = vmatpush1.msra.mxu0 0.0
      %729 = vmatprep.subr.mxu0 0.0
      %730 = vmatpush1.msra.mxu0 0.0
      %731 = vmatprep.subr.mxu0 0.0
      %732 = vmatpush1.msra.mxu0 0.0
      %733 = vmatprep.subr.mxu0 0.0
      %734 = vmatpush1.msra.mxu0 0.0
      %735 = vmatprep.subr.mxu0 0.0
      %736 = vmatpush1.msra.mxu0 %v703
      %737 = vmatprep.subr.mxu0 0.0
      %738 = vmatpush2.msra.mxu0 0.0
      %739 = vmatprep.subr.mxu0 0.0
      %740 = vmatpush2.msra.mxu0 0.0
      %741 = vmatprep.subr.mxu0 0.0
      %742 = vmatpush2.msra.mxu0 0.0
      %743 = vmatprep.subr.mxu0 0.0
      %744 = vmatpush2.msra.mxu0 0.0
      %745 = vmatprep.subr.mxu0 0.0
      %746 = vmatpush2.msra.mxu0 0.0
      %747 = vmatprep.subr.mxu0 0.0
      %748 = vmatpush2.msra.mxu0 0.0
      %749 = vmatprep.subr.mxu0 0.0
      %750 = vmatpush2.msra.mxu0 0.0
      %751 = vmatprep.subr.mxu0 0.0
      %752 = vmatpush2.msra.mxu0 0.0
      %753 = vmatprep.subr.mxu0 0.0
      %754 = vmatpush2.msra.mxu0 0.0
      %755 = vmatprep.subr.mxu0 0.0
      %756 = vmatpush2.msra.mxu0 0.0
      %757 = vmatprep.subr.mxu0 0.0
      %758 = vmatpush2.msra.mxu0 0.0
      %759 = vmatprep.subr.mxu0 0.0
      %760 = vmatpush2.msra.mxu0 0.0
      %761 = vmatprep.subr.mxu0 0.0
      %762 = vmatpush2.msra.mxu0 0.0
      %763 = vmatprep.subr.mxu0 0.0
      %764 = vmatpush2.msra.mxu0 0.0
      %765 = vmatprep.subr.mxu0 0.0
      %766 = vmatpush2.msra.mxu0 0.0
      %767 = vmatprep.subr.mxu0 0.0
      %768 = vmatpush2.msra.mxu0 0.0
      %769 = vmatprep.mubr.f32.mxu0 0.0
      %770 = vmatmul.mubr.f32.gmra.mxu0 %v655
      %v771 = vpop.f32.mrf.mxu0
      %v772 = vadd.f32 0.0, %v771
      %v773 = vpop.f32.mrf.mxu0
      %774 = vmatprep.mubr.f32.mxu0 0.0
      %775 = vmatmul.mubr.f32.gmra.mxu0 %v658
      %v776 = vpop.f32.mrf.mxu0
      %v777 = vadd.f32 0.0, %v776
      %v778 = vpop.f32.mrf.mxu0
      %779 = vmatprep.mubr.f32.mxu0 0.0
      %780 = vmatmul.mubr.f32.gmra.mxu0 %v661
      %v781 = vpop.f32.mrf.mxu0
      %v782 = vadd.f32 0.0, %v781
      %v783 = vpop.f32.mrf.mxu0
      %784 = vmatprep.mubr.f32.mxu0 0.0
      %785 = vmatmul.mubr.f32.gmra.mxu0 %v664
      %v786 = vpop.f32.mrf.mxu0
      %v787 = vadd.f32 0.0, %v786
      %v788 = vpop.f32.mrf.mxu0
      %789 = vmatprep.mubr.f32.mxu0 0.0
      %790 = vmatmul.mubr.f32.gmra.mxu0 %v667
      %v791 = vpop.f32.mrf.mxu0
      %v792 = vadd.f32 0.0, %v791
      %v793 = vpop.f32.mrf.mxu0
      %794 = vmatprep.mubr.f32.mxu0 0.0
      %795 = vmatmul.mubr.f32.gmra.mxu0 %v670
      %v796 = vpop.f32.mrf.mxu0
      %v797 = vadd.f32 0.0, %v796
      %v798 = vpop.f32.mrf.mxu0
      %799 = vmatprep.mubr.f32.mxu0 0.0
      %800 = vmatmul.mubr.f32.gmra.mxu0 %v673
      %v801 = vpop.f32.mrf.mxu0
      %v802 = vadd.f32 0.0, %v801
      %v803 = vpop.f32.mrf.mxu0
      %804 = vmatprep.mubr.f32.mxu0 0.0
      %805 = vmatmul.mubr.f32.gmra.mxu0 %v676
      %v806 = vpop.f32.mrf.mxu0
      %v807 = vadd.f32 0.0, %v806
      %v808 = vpop.f32.mrf.mxu0
      %809 = vmatprep.mubr.f32.mxu0 0.0
      %810 = vmatmul.mubr.f32.gmra.mxu0 %v679
      %v811 = vpop.f32.mrf.mxu0
      %v812 = vadd.f32 0.0, %v811
      %v813 = vpop.f32.mrf.mxu0
      %814 = vmatprep.mubr.f32.mxu0 0.0
      %815 = vmatmul.mubr.f32.gmra.mxu0 %v682
      %v816 = vpop.f32.mrf.mxu0
      %v817 = vadd.f32 0.0, %v816
      %v818 = vpop.f32.mrf.mxu0
      %819 = vmatprep.mubr.f32.mxu0 0.0
      %820 = vmatmul.mubr.f32.gmra.mxu0 %v685
      %v821 = vpop.f32.mrf.mxu0
      %v822 = vadd.f32 0.0, %v821
      %v823 = vpop.f32.mrf.mxu0
      %824 = vmatprep.mubr.f32.mxu0 0.0
      %825 = vmatmul.mubr.f32.gmra.mxu0 %v688
      %v826 = vpop.f32.mrf.mxu0
      %v827 = vadd.f32 0.0, %v826
      %v828 = vpop.f32.mrf.mxu0
      %829 = vmatprep.mubr.f32.mxu0 0.0
      %830 = vmatmul.mubr.f32.gmra.mxu0 %v691
      %v831 = vpop.f32.mrf.mxu0
      %v832 = vadd.f32 0.0, %v831
      %v833 = vpop.f32.mrf.mxu0
      %834 = vmatprep.mubr.f32.mxu0 0.0
      %835 = vmatmul.mubr.f32.gmra.mxu0 %v694
      %v836 = vpop.f32.mrf.mxu0
      %v837 = vadd.f32 0.0, %v836
      %v838 = vpop.f32.mrf.mxu0
      %839 = vmatprep.mubr.f32.mxu0 0.0
      %840 = vmatmul.mubr.f32.gmra.mxu0 %v697
      %v841 = vpop.f32.mrf.mxu0
      %v842 = vadd.f32 0.0, %v841
      %v843 = vpop.f32.mrf.mxu0
      %844 = vmatprep.mubr.f32.mxu0 0.0
      %845 = vmatmul.mubr.f32.gmra.mxu0 %v700
      %v846 = vpop.f32.mrf.mxu0
      %v847 = vadd.f32 0.0, %v846
      %v848 = vpop.f32.mrf.mxu0
      %849 = vdwg.mxu0
      %v850 = vadd.f32 %v558, %v772
      %v851 = vadd.f32 %v563, %v777
      %v852 = vadd.f32 %v568, %v782
      %v853 = vadd.f32 %v573, %v787
      %v854 = vadd.f32 %v578, %v792
      %v855 = vadd.f32 %v583, %v797
      %v856 = vadd.f32 %v588, %v802
      %v857 = vadd.f32 %v593, %v807
      %v858 = vadd.f32 %v598, %v812
      %v859 = vadd.f32 %v603, %v817
      %v860 = vadd.f32 %v608, %v822
      %v861 = vadd.f32 %v613, %v827
      %v862 = vadd.f32 %v618, %v832
      %v863 = vadd.f32 %v623, %v837
      %v864 = vadd.f32 %v628, %v842
      %v865 = vadd.f32 %v633, %v847
      %s866 = scalar_lea.vmem %s197, 24
      %v867 = vld [vmem:[%s866] sm:$0xff]
      %v868 = vld [vmem:[%s866 + $0x8] sm:$0xff]
      %v869 = vld [vmem:[%s866 + $0x18] sm:$0xff]
      %v870 = vld [vmem:[%s866 + $0x20] sm:$0xff]
      %v871 = vld [vmem:[%s866 + $0x30] sm:$0xff]
      %v872 = vld [vmem:[%s866 + $0x38] sm:$0xff]
      %v873 = vld [vmem:[%s866 + $0x48] sm:$0xff]
      %v874 = vld [vmem:[%s866 + $0x50] sm:$0xff]
      %v875 = vld [vmem:[%s866 + $0x60] sm:$0xff]
      %v876 = vld [vmem:[%s866 + $0x68] sm:$0xff]
      %v877 = vld [vmem:[%s866 + $0x78] sm:$0xff]
      %v878 = vld [vmem:[%s866 + $0x80] sm:$0xff]
      %v879 = vld [vmem:[%s866 + $0x90] sm:$0xff]
      %v880 = vld [vmem:[%s866 + $0x98] sm:$0xff]
      %v881 = vld [vmem:[%s866 + $0xa8] sm:$0xff]
      %v882 = vld [vmem:[%s866 + $0xb0] sm:$0xff]
      %s883 = scalar_lea.vmem %s1, 12
      %v884 = vld [vmem:[%s883] sm:$0x7]
      %v886 = vsel %vm242, %v867, 0
      %v889 = vsel %vm242, %v868, 0
      %v892 = vsel %vm242, %v869, 0
      %v895 = vsel %vm242, %v870, 0
      %v898 = vsel %vm242, %v871, 0
      %v901 = vsel %vm242, %v872, 0
      %v904 = vsel %vm242, %v873, 0
      %v907 = vsel %vm242, %v874, 0
      %v910 = vsel %vm242, %v875, 0
      %v913 = vsel %vm242, %v876, 0
      %v916 = vsel %vm242, %v877, 0
      %v919 = vsel %vm242, %v878, 0
      %v922 = vsel %vm242, %v879, 0
      %v925 = vsel %vm242, %v880, 0
      %v928 = vsel %vm242, %v881, 0
      %v931 = vsel %vm242, %v882, 0
      %v934 = vsel %vm291, %v884, 0
      %936 = vmatprep.subr.mxu0 0.0
      %937 = vmatpush1.msra.mxu0 0.0
      %938 = vmatprep.subr.mxu0 0.0
      %939 = vmatpush1.msra.mxu0 0.0
      %940 = vmatprep.subr.mxu0 0.0
      %941 = vmatpush1.msra.mxu0 0.0
      %942 = vmatprep.subr.mxu0 0.0
      %943 = vmatpush1.msra.mxu0 0.0
      %944 = vmatprep.subr.mxu0 0.0
      %945 = vmatpush1.msra.mxu0 0.0
      %946 = vmatprep.subr.mxu0 0.0
      %947 = vmatpush1.msra.mxu0 0.0
      %948 = vmatprep.subr.mxu0 0.0
      %949 = vmatpush1.msra.mxu0 0.0
      %950 = vmatprep.subr.mxu0 0.0
      %951 = vmatpush1.msra.mxu0 0.0
      %952 = vmatprep.subr.mxu0 0.0
      %953 = vmatpush1.msra.mxu0 0.0
      %954 = vmatprep.subr.mxu0 0.0
      %955 = vmatpush1.msra.mxu0 0.0
      %956 = vmatprep.subr.mxu0 0.0
      %957 = vmatpush1.msra.mxu0 0.0
      %958 = vmatprep.subr.mxu0 0.0
      %959 = vmatpush1.msra.mxu0 0.0
      %960 = vmatprep.subr.mxu0 0.0
      %961 = vmatpush1.msra.mxu0 0.0
      %962 = vmatprep.subr.mxu0 0.0
      %963 = vmatpush1.msra.mxu0 0.0
      %964 = vmatprep.subr.mxu0 0.0
      %965 = vmatpush1.msra.mxu0 0.0
      %966 = vmatprep.subr.mxu0 0.0
      %967 = vmatpush1.msra.mxu0 %v934
      %968 = vmatprep.subr.mxu0 0.0
      %969 = vmatpush2.msra.mxu0 0.0
      %970 = vmatprep.subr.mxu0 0.0
      %971 = vmatpush2.msra.mxu0 0.0
      %972 = vmatprep.subr.mxu0 0.0
      %973 = vmatpush2.msra.mxu0 0.0
      %974 = vmatprep.subr.mxu0 0.0
      %975 = vmatpush2.msra.mxu0 0.0
      %976 = vmatprep.subr.mxu0 0.0
      %977 = vmatpush2.msra.mxu0 0.0
      %978 = vmatprep.subr.mxu0 0.0
      %979 = vmatpush2.msra.mxu0 0.0
      %980 = vmatprep.subr.mxu0 0.0
      %981 = vmatpush2.msra.mxu0 0.0
      %982 = vmatprep.subr.mxu0 0.0
      %983 = vmatpush2.msra.mxu0 0.0
      %984 = vmatprep.subr.mxu0 0.0
      %985 = vmatpush2.msra.mxu0 0.0
      %986 = vmatprep.subr.mxu0 0.0
      %987 = vmatpush2.msra.mxu0 0.0
      %988 = vmatprep.subr.mxu0 0.0
      %989 = vmatpush2.msra.mxu0 0.0
      %990 = vmatprep.subr.mxu0 0.0
      %991 = vmatpush2.msra.mxu0 0.0
      %992 = vmatprep.subr.mxu0 0.0
      %993 = vmatpush2.msra.mxu0 0.0
      %994 = vmatprep.subr.mxu0 0.0
      %995 = vmatpush2.msra.mxu0 0.0
      %996 = vmatprep.subr.mxu0 0.0
      %997 = vmatpush2.msra.mxu0 0.0
      %998 = vmatprep.subr.mxu0 0.0
      %999 = vmatpush2.msra.mxu0 0.0
      %1000 = vmatprep.mubr.f32.mxu0 0.0
      %1001 = vmatmul.mubr.f32.gmra.mxu0 %v886
      %v1002 = vpop.f32.mrf.mxu0
      %v1003 = vadd.f32 0.0, %v1002
      %v1004 = vpop.f32.mrf.mxu0
      %1005 = vmatprep.mubr.f32.mxu0 0.0
      %1006 = vmatmul.mubr.f32.gmra.mxu0 %v889
      %v1007 = vpop.f32.mrf.mxu0
      %v1008 = vadd.f32 0.0, %v1007
      %v1009 = vpop.f32.mrf.mxu0
      %1010 = vmatprep.mubr.f32.mxu0 0.0
      %1011 = vmatmul.mubr.f32.gmra.mxu0 %v892
      %v1012 = vpop.f32.mrf.mxu0
      %v1013 = vadd.f32 0.0, %v1012
      %v1014 = vpop.f32.mrf.mxu0
      %1015 = vmatprep.mubr.f32.mxu0 0.0
      %1016 = vmatmul.mubr.f32.gmra.mxu0 %v895
      %v1017 = vpop.f32.mrf.mxu0
      %v1018 = vadd.f32 0.0, %v1017
      %v1019 = vpop.f32.mrf.mxu0
      %1020 = vmatprep.mubr.f32.mxu0 0.0
      %1021 = vmatmul.mubr.f32.gmra.mxu0 %v898
      %v1022 = vpop.f32.mrf.mxu0
      %v1023 = vadd.f32 0.0, %v1022
      %v1024 = vpop.f32.mrf.mxu0
      %1025 = vmatprep.mubr.f32.mxu0 0.0
      %1026 = vmatmul.mubr.f32.gmra.mxu0 %v901
      %v1027 = vpop.f32.mrf.mxu0
      %v1028 = vadd.f32 0.0, %v1027
      %v1029 = vpop.f32.mrf.mxu0
      %1030 = vmatprep.mubr.f32.mxu0 0.0
      %1031 = vmatmul.mubr.f32.gmra.mxu0 %v904
      %v1032 = vpop.f32.mrf.mxu0
      %v1033 = vadd.f32 0.0, %v1032
      %v1034 = vpop.f32.mrf.mxu0
      %1035 = vmatprep.mubr.f32.mxu0 0.0
      %1036 = vmatmul.mubr.f32.gmra.mxu0 %v907
      %v1037 = vpop.f32.mrf.mxu0
      %v1038 = vadd.f32 0.0, %v1037
      %v1039 = vpop.f32.mrf.mxu0
      %1040 = vmatprep.mubr.f32.mxu0 0.0
      %1041 = vmatmul.mubr.f32.gmra.mxu0 %v910
      %v1042 = vpop.f32.mrf.mxu0
      %v1043 = vadd.f32 0.0, %v1042
      %v1044 = vpop.f32.mrf.mxu0
      %1045 = vmatprep.mubr.f32.mxu0 0.0
      %1046 = vmatmul.mubr.f32.gmra.mxu0 %v913
      %v1047 = vpop.f32.mrf.mxu0
      %v1048 = vadd.f32 0.0, %v1047
      %v1049 = vpop.f32.mrf.mxu0
      %1050 = vmatprep.mubr.f32.mxu0 0.0
      %1051 = vmatmul.mubr.f32.gmra.mxu0 %v916
      %v1052 = vpop.f32.mrf.mxu0
      %v1053 = vadd.f32 0.0, %v1052
      %v1054 = vpop.f32.mrf.mxu0
      %1055 = vmatprep.mubr.f32.mxu0 0.0
      %1056 = vmatmul.mubr.f32.gmra.mxu0 %v919
      %v1057 = vpop.f32.mrf.mxu0
      %v1058 = vadd.f32 0.0, %v1057
      %v1059 = vpop.f32.mrf.mxu0
      %1060 = vmatprep.mubr.f32.mxu0 0.0
      %1061 = vmatmul.mubr.f32.gmra.mxu0 %v922
      %v1062 = vpop.f32.mrf.mxu0
      %v1063 = vadd.f32 0.0, %v1062
      %v1064 = vpop.f32.mrf.mxu0
      %1065 = vmatprep.mubr.f32.mxu0 0.0
      %1066 = vmatmul.mubr.f32.gmra.mxu0 %v925
      %v1067 = vpop.f32.mrf.mxu0
      %v1068 = vadd.f32 0.0, %v1067
      %v1069 = vpop.f32.mrf.mxu0
      %1070 = vmatprep.mubr.f32.mxu0 0.0
      %1071 = vmatmul.mubr.f32.gmra.mxu0 %v928
      %v1072 = vpop.f32.mrf.mxu0
      %v1073 = vadd.f32 0.0, %v1072
      %v1074 = vpop.f32.mrf.mxu0
      %1075 = vmatprep.mubr.f32.mxu0 0.0
      %1076 = vmatmul.mubr.f32.gmra.mxu0 %v931
      %v1077 = vpop.f32.mrf.mxu0
      %v1078 = vadd.f32 0.0, %v1077
      %v1079 = vpop.f32.mrf.mxu0
      %1080 = vdwg.mxu0
      %v1081 = vadd.f32 %v850, %v1003
      %v1082 = vadd.f32 %v851, %v1008
      %v1083 = vadd.f32 %v852, %v1013
      %v1084 = vadd.f32 %v853, %v1018
      %v1085 = vadd.f32 %v854, %v1023
      %v1086 = vadd.f32 %v855, %v1028
      %v1087 = vadd.f32 %v856, %v1033
      %v1088 = vadd.f32 %v857, %v1038
      %v1089 = vadd.f32 %v858, %v1043
      %v1090 = vadd.f32 %v859, %v1048
      %v1091 = vadd.f32 %v860, %v1053
      %v1092 = vadd.f32 %v861, %v1058
      %v1093 = vadd.f32 %v862, %v1063
      %v1094 = vadd.f32 %v863, %v1068
      %v1095 = vadd.f32 %v864, %v1073
      %v1096 = vadd.f32 %v865, %v1078
      %v1097 = vld [vmem:[%s866 + $0x1] sm:$0xff]
      %v1098 = vld [vmem:[%s866 + $0x9] sm:$0xff]
      %v1099 = vld [vmem:[%s866 + $0x19] sm:$0xff]
      %v1100 = vld [vmem:[%s866 + $0x21] sm:$0xff]
      %v1101 = vld [vmem:[%s866 + $0x31] sm:$0xff]
      %v1102 = vld [vmem:[%s866 + $0x39] sm:$0xff]
      %v1103 = vld [vmem:[%s866 + $0x49] sm:$0xff]
      %v1104 = vld [vmem:[%s866 + $0x51] sm:$0xff]
      %v1105 = vld [vmem:[%s866 + $0x61] sm:$0xff]
      %v1106 = vld [vmem:[%s866 + $0x69] sm:$0xff]
      %v1107 = vld [vmem:[%s866 + $0x79] sm:$0xff]
      %v1108 = vld [vmem:[%s866 + $0x81] sm:$0xff]
      %v1109 = vld [vmem:[%s866 + $0x91] sm:$0xff]
      %v1110 = vld [vmem:[%s866 + $0x99] sm:$0xff]
      %v1111 = vld [vmem:[%s866 + $0xa9] sm:$0xff]
      %v1112 = vld [vmem:[%s866 + $0xb1] sm:$0xff]
      %s1113 = scalar_lea.vmem %s1, 16
      %v1114 = vld [vmem:[%s1113] sm:$0x7]
      %v1116 = vsel %vm242, %v1097, 0
      %v1119 = vsel %vm242, %v1098, 0
      %v1122 = vsel %vm242, %v1099, 0
      %v1125 = vsel %vm242, %v1100, 0
      %v1128 = vsel %vm242, %v1101, 0
      %v1131 = vsel %vm242, %v1102, 0
      %v1134 = vsel %vm242, %v1103, 0
      %v1137 = vsel %vm242, %v1104, 0
      %v1140 = vsel %vm242, %v1105, 0
      %v1143 = vsel %vm242, %v1106, 0
      %v1146 = vsel %vm242, %v1107, 0
      %v1149 = vsel %vm242, %v1108, 0
      %v1152 = vsel %vm242, %v1109, 0
      %v1155 = vsel %vm242, %v1110, 0
      %v1158 = vsel %vm242, %v1111, 0
      %v1161 = vsel %vm242, %v1112, 0
      %v1164 = vsel %vm291, %v1114, 0
      %1166 = vmatprep.subr.mxu0 0.0
      %1167 = vmatpush1.msra.mxu0 0.0
      %1168 = vmatprep.subr.mxu0 0.0
      %1169 = vmatpush1.msra.mxu0 0.0
      %1170 = vmatprep.subr.mxu0 0.0
      %1171 = vmatpush1.msra.mxu0 0.0
      %1172 = vmatprep.subr.mxu0 0.0
      %1173 = vmatpush1.msra.mxu0 0.0
      %1174 = vmatprep.subr.mxu0 0.0
      %1175 = vmatpush1.msra.mxu0 0.0
      %1176 = vmatprep.subr.mxu0 0.0
      %1177 = vmatpush1.msra.mxu0 0.0
      %1178 = vmatprep.subr.mxu0 0.0
      %1179 = vmatpush1.msra.mxu0 0.0
      %1180 = vmatprep.subr.mxu0 0.0
      %1181 = vmatpush1.msra.mxu0 0.0
      %1182 = vmatprep.subr.mxu0 0.0
      %1183 = vmatpush1.msra.mxu0 0.0
      %1184 = vmatprep.subr.mxu0 0.0
      %1185 = vmatpush1.msra.mxu0 0.0
      %1186 = vmatprep.subr.mxu0 0.0
      %1187 = vmatpush1.msra.mxu0 0.0
      %1188 = vmatprep.subr.mxu0 0.0
      %1189 = vmatpush1.msra.mxu0 0.0
      %1190 = vmatprep.subr.mxu0 0.0
      %1191 = vmatpush1.msra.mxu0 0.0
      %1192 = vmatprep.subr.mxu0 0.0
      %1193 = vmatpush1.msra.mxu0 0.0
      %1194 = vmatprep.subr.mxu0 0.0
      %1195 = vmatpush1.msra.mxu0 0.0
      %1196 = vmatprep.subr.mxu0 0.0
      %1197 = vmatpush1.msra.mxu0 %v1164
      %1198 = vmatprep.subr.mxu0 0.0
      %1199 = vmatpush2.msra.mxu0 0.0
      %1200 = vmatprep.subr.mxu0 0.0
      %1201 = vmatpush2.msra.mxu0 0.0
      %1202 = vmatprep.subr.mxu0 0.0
      %1203 = vmatpush2.msra.mxu0 0.0
      %1204 = vmatprep.subr.mxu0 0.0
      %1205 = vmatpush2.msra.mxu0 0.0
      %1206 = vmatprep.subr.mxu0 0.0
      %1207 = vmatpush2.msra.mxu0 0.0
      %1208 = vmatprep.subr.mxu0 0.0
      %1209 = vmatpush2.msra.mxu0 0.0
      %1210 = vmatprep.subr.mxu0 0.0
      %1211 = vmatpush2.msra.mxu0 0.0
      %1212 = vmatprep.subr.mxu0 0.0
      %1213 = vmatpush2.msra.mxu0 0.0
      %1214 = vmatprep.subr.mxu0 0.0
      %1215 = vmatpush2.msra.mxu0 0.0
      %1216 = vmatprep.subr.mxu0 0.0
      %1217 = vmatpush2.msra.mxu0 0.0
      %1218 = vmatprep.subr.mxu0 0.0
      %1219 = vmatpush2.msra.mxu0 0.0
      %1220 = vmatprep.subr.mxu0 0.0
      %1221 = vmatpush2.msra.mxu0 0.0
      %1222 = vmatprep.subr.mxu0 0.0
      %1223 = vmatpush2.msra.mxu0 0.0
      %1224 = vmatprep.subr.mxu0 0.0
      %1225 = vmatpush2.msra.mxu0 0.0
      %1226 = vmatprep.subr.mxu0 0.0
      %1227 = vmatpush2.msra.mxu0 0.0
      %1228 = vmatprep.subr.mxu0 0.0
      %1229 = vmatpush2.msra.mxu0 0.0
      %1230 = vmatprep.mubr.f32.mxu0 0.0
      %1231 = vmatmul.mubr.f32.gmra.mxu0 %v1116
      %v1232 = vpop.f32.mrf.mxu0
      %v1233 = vadd.f32 0.0, %v1232
      %v1234 = vpop.f32.mrf.mxu0
      %1235 = vmatprep.mubr.f32.mxu0 0.0
      %1236 = vmatmul.mubr.f32.gmra.mxu0 %v1119
      %v1237 = vpop.f32.mrf.mxu0
      %v1238 = vadd.f32 0.0, %v1237
      %v1239 = vpop.f32.mrf.mxu0
      %1240 = vmatprep.mubr.f32.mxu0 0.0
      %1241 = vmatmul.mubr.f32.gmra.mxu0 %v1122
      %v1242 = vpop.f32.mrf.mxu0
      %v1243 = vadd.f32 0.0, %v1242
      %v1244 = vpop.f32.mrf.mxu0
      %1245 = vmatprep.mubr.f32.mxu0 0.0
      %1246 = vmatmul.mubr.f32.gmra.mxu0 %v1125
      %v1247 = vpop.f32.mrf.mxu0
      %v1248 = vadd.f32 0.0, %v1247
      %v1249 = vpop.f32.mrf.mxu0
      %1250 = vmatprep.mubr.f32.mxu0 0.0
      %1251 = vmatmul.mubr.f32.gmra.mxu0 %v1128
      %v1252 = vpop.f32.mrf.mxu0
      %v1253 = vadd.f32 0.0, %v1252
      %v1254 = vpop.f32.mrf.mxu0
      %1255 = vmatprep.mubr.f32.mxu0 0.0
      %1256 = vmatmul.mubr.f32.gmra.mxu0 %v1131
      %v1257 = vpop.f32.mrf.mxu0
      %v1258 = vadd.f32 0.0, %v1257
      %v1259 = vpop.f32.mrf.mxu0
      %1260 = vmatprep.mubr.f32.mxu0 0.0
      %1261 = vmatmul.mubr.f32.gmra.mxu0 %v1134
      %v1262 = vpop.f32.mrf.mxu0
      %v1263 = vadd.f32 0.0, %v1262
      %v1264 = vpop.f32.mrf.mxu0
      %1265 = vmatprep.mubr.f32.mxu0 0.0
      %1266 = vmatmul.mubr.f32.gmra.mxu0 %v1137
      %v1267 = vpop.f32.mrf.mxu0
      %v1268 = vadd.f32 0.0, %v1267
      %v1269 = vpop.f32.mrf.mxu0
      %1270 = vmatprep.mubr.f32.mxu0 0.0
      %1271 = vmatmul.mubr.f32.gmra.mxu0 %v1140
      %v1272 = vpop.f32.mrf.mxu0
      %v1273 = vadd.f32 0.0, %v1272
      %v1274 = vpop.f32.mrf.mxu0
      %1275 = vmatprep.mubr.f32.mxu0 0.0
      %1276 = vmatmul.mubr.f32.gmra.mxu0 %v1143
      %v1277 = vpop.f32.mrf.mxu0
      %v1278 = vadd.f32 0.0, %v1277
      %v1279 = vpop.f32.mrf.mxu0
      %1280 = vmatprep.mubr.f32.mxu0 0.0
      %1281 = vmatmul.mubr.f32.gmra.mxu0 %v1146
      %v1282 = vpop.f32.mrf.mxu0
      %v1283 = vadd.f32 0.0, %v1282
      %v1284 = vpop.f32.mrf.mxu0
      %1285 = vmatprep.mubr.f32.mxu0 0.0
      %1286 = vmatmul.mubr.f32.gmra.mxu0 %v1149
      %v1287 = vpop.f32.mrf.mxu0
      %v1288 = vadd.f32 0.0, %v1287
      %v1289 = vpop.f32.mrf.mxu0
      %1290 = vmatprep.mubr.f32.mxu0 0.0
      %1291 = vmatmul.mubr.f32.gmra.mxu0 %v1152
      %v1292 = vpop.f32.mrf.mxu0
      %v1293 = vadd.f32 0.0, %v1292
      %v1294 = vpop.f32.mrf.mxu0
      %1295 = vmatprep.mubr.f32.mxu0 0.0
      %1296 = vmatmul.mubr.f32.gmra.mxu0 %v1155
      %v1297 = vpop.f32.mrf.mxu0
      %v1298 = vadd.f32 0.0, %v1297
      %v1299 = vpop.f32.mrf.mxu0
      %1300 = vmatprep.mubr.f32.mxu0 0.0
      %1301 = vmatmul.mubr.f32.gmra.mxu0 %v1158
      %v1302 = vpop.f32.mrf.mxu0
      %v1303 = vadd.f32 0.0, %v1302
      %v1304 = vpop.f32.mrf.mxu0
      %1305 = vmatprep.mubr.f32.mxu0 0.0
      %1306 = vmatmul.mubr.f32.gmra.mxu0 %v1161
      %v1307 = vpop.f32.mrf.mxu0
      %v1308 = vadd.f32 0.0, %v1307
      %v1309 = vpop.f32.mrf.mxu0
      %1310 = vdwg.mxu0
      %v1311 = vadd.f32 %v1081, %v1233
      %v1312 = vadd.f32 %v1082, %v1238
      %v1313 = vadd.f32 %v1083, %v1243
      %v1314 = vadd.f32 %v1084, %v1248
      %v1315 = vadd.f32 %v1085, %v1253
      %v1316 = vadd.f32 %v1086, %v1258
      %v1317 = vadd.f32 %v1087, %v1263
      %v1318 = vadd.f32 %v1088, %v1268
      %v1319 = vadd.f32 %v1089, %v1273
      %v1320 = vadd.f32 %v1090, %v1278
      %v1321 = vadd.f32 %v1091, %v1283
      %v1322 = vadd.f32 %v1092, %v1288
      %v1323 = vadd.f32 %v1093, %v1293
      %v1324 = vadd.f32 %v1094, %v1298
      %v1325 = vadd.f32 %v1095, %v1303
      %v1326 = vadd.f32 %v1096, %v1308
      %v1327 = vld [vmem:[%s866 + $0x2] sm:$0xff]
      %v1328 = vld [vmem:[%s866 + $0xa] sm:$0xff]
      %v1329 = vld [vmem:[%s866 + $0x1a] sm:$0xff]
      %v1330 = vld [vmem:[%s866 + $0x22] sm:$0xff]
      %v1331 = vld [vmem:[%s866 + $0x32] sm:$0xff]
      %v1332 = vld [vmem:[%s866 + $0x3a] sm:$0xff]
      %v1333 = vld [vmem:[%s866 + $0x4a] sm:$0xff]
      %v1334 = vld [vmem:[%s866 + $0x52] sm:$0xff]
      %v1335 = vld [vmem:[%s866 + $0x62] sm:$0xff]
      %v1336 = vld [vmem:[%s866 + $0x6a] sm:$0xff]
      %v1337 = vld [vmem:[%s866 + $0x7a] sm:$0xff]
      %v1338 = vld [vmem:[%s866 + $0x82] sm:$0xff]
      %v1339 = vld [vmem:[%s866 + $0x92] sm:$0xff]
      %v1340 = vld [vmem:[%s866 + $0x9a] sm:$0xff]
      %v1341 = vld [vmem:[%s866 + $0xaa] sm:$0xff]
      %v1342 = vld [vmem:[%s866 + $0xb2] sm:$0xff]
      %s1343 = scalar_lea.vmem %s1, 20
      %v1344 = vld [vmem:[%s1343] sm:$0x7]
      %v1346 = vsel %vm242, %v1327, 0
      %v1349 = vsel %vm242, %v1328, 0
      %v1352 = vsel %vm242, %v1329, 0
      %v1355 = vsel %vm242, %v1330, 0
      %v1358 = vsel %vm242, %v1331, 0
      %v1361 = vsel %vm242, %v1332, 0
      %v1364 = vsel %vm242, %v1333, 0
      %v1367 = vsel %vm242, %v1334, 0
      %v1370 = vsel %vm242, %v1335, 0
      %v1373 = vsel %vm242, %v1336, 0
      %v1376 = vsel %vm242, %v1337, 0
      %v1379 = vsel %vm242, %v1338, 0
      %v1382 = vsel %vm242, %v1339, 0
      %v1385 = vsel %vm242, %v1340, 0
      %v1388 = vsel %vm242, %v1341, 0
      %v1391 = vsel %vm242, %v1342, 0
      %v1394 = vsel %vm291, %v1344, 0
      %1396 = vmatprep.subr.mxu0 0.0
      %1397 = vmatpush1.msra.mxu0 0.0
      %1398 = vmatprep.subr.mxu0 0.0
      %1399 = vmatpush1.msra.mxu0 0.0
      %1400 = vmatprep.subr.mxu0 0.0
      %1401 = vmatpush1.msra.mxu0 0.0
      %1402 = vmatprep.subr.mxu0 0.0
      %1403 = vmatpush1.msra.mxu0 0.0
      %1404 = vmatprep.subr.mxu0 0.0
      %1405 = vmatpush1.msra.mxu0 0.0
      %1406 = vmatprep.subr.mxu0 0.0
      %1407 = vmatpush1.msra.mxu0 0.0
      %1408 = vmatprep.subr.mxu0 0.0
      %1409 = vmatpush1.msra.mxu0 0.0
      %1410 = vmatprep.subr.mxu0 0.0
      %1411 = vmatpush1.msra.mxu0 0.0
      %1412 = vmatprep.subr.mxu0 0.0
      %1413 = vmatpush1.msra.mxu0 0.0
      %1414 = vmatprep.subr.mxu0 0.0
      %1415 = vmatpush1.msra.mxu0 0.0
      %1416 = vmatprep.subr.mxu0 0.0
      %1417 = vmatpush1.msra.mxu0 0.0
      %1418 = vmatprep.subr.mxu0 0.0
      %1419 = vmatpush1.msra.mxu0 0.0
      %1420 = vmatprep.subr.mxu0 0.0
      %1421 = vmatpush1.msra.mxu0 0.0
      %1422 = vmatprep.subr.mxu0 0.0
      %1423 = vmatpush1.msra.mxu0 0.0
      %1424 = vmatprep.subr.mxu0 0.0
      %1425 = vmatpush1.msra.mxu0 0.0
      %1426 = vmatprep.subr.mxu0 0.0
      %1427 = vmatpush1.msra.mxu0 %v1394
      %1428 = vmatprep.subr.mxu0 0.0
      %1429 = vmatpush2.msra.mxu0 0.0
      %1430 = vmatprep.subr.mxu0 0.0
      %1431 = vmatpush2.msra.mxu0 0.0
      %1432 = vmatprep.subr.mxu0 0.0
      %1433 = vmatpush2.msra.mxu0 0.0
      %1434 = vmatprep.subr.mxu0 0.0
      %1435 = vmatpush2.msra.mxu0 0.0
      %1436 = vmatprep.subr.mxu0 0.0
      %1437 = vmatpush2.msra.mxu0 0.0
      %1438 = vmatprep.subr.mxu0 0.0
      %1439 = vmatpush2.msra.mxu0 0.0
      %1440 = vmatprep.subr.mxu0 0.0
      %1441 = vmatpush2.msra.mxu0 0.0
      %1442 = vmatprep.subr.mxu0 0.0
      %1443 = vmatpush2.msra.mxu0 0.0
      %1444 = vmatprep.subr.mxu0 0.0
      %1445 = vmatpush2.msra.mxu0 0.0
      %1446 = vmatprep.subr.mxu0 0.0
      %1447 = vmatpush2.msra.mxu0 0.0
      %1448 = vmatprep.subr.mxu0 0.0
      %1449 = vmatpush2.msra.mxu0 0.0
      %1450 = vmatprep.subr.mxu0 0.0
      %1451 = vmatpush2.msra.mxu0 0.0
      %1452 = vmatprep.subr.mxu0 0.0
      %1453 = vmatpush2.msra.mxu0 0.0
      %1454 = vmatprep.subr.mxu0 0.0
      %1455 = vmatpush2.msra.mxu0 0.0
      %1456 = vmatprep.subr.mxu0 0.0
      %1457 = vmatpush2.msra.mxu0 0.0
      %1458 = vmatprep.subr.mxu0 0.0
      %1459 = vmatpush2.msra.mxu0 0.0
      %1460 = vmatprep.mubr.f32.mxu0 0.0
      %1461 = vmatmul.mubr.f32.gmra.mxu0 %v1346
      %v1462 = vpop.f32.mrf.mxu0
      %v1463 = vadd.f32 0.0, %v1462
      %v1464 = vpop.f32.mrf.mxu0
      %1465 = vmatprep.mubr.f32.mxu0 0.0
      %1466 = vmatmul.mubr.f32.gmra.mxu0 %v1349
      %v1467 = vpop.f32.mrf.mxu0
      %v1468 = vadd.f32 0.0, %v1467
      %v1469 = vpop.f32.mrf.mxu0
      %1470 = vmatprep.mubr.f32.mxu0 0.0
      %1471 = vmatmul.mubr.f32.gmra.mxu0 %v1352
      %v1472 = vpop.f32.mrf.mxu0
      %v1473 = vadd.f32 0.0, %v1472
      %v1474 = vpop.f32.mrf.mxu0
      %1475 = vmatprep.mubr.f32.mxu0 0.0
      %1476 = vmatmul.mubr.f32.gmra.mxu0 %v1355
      %v1477 = vpop.f32.mrf.mxu0
      %v1478 = vadd.f32 0.0, %v1477
      %v1479 = vpop.f32.mrf.mxu0
      %1480 = vmatprep.mubr.f32.mxu0 0.0
      %1481 = vmatmul.mubr.f32.gmra.mxu0 %v1358
      %v1482 = vpop.f32.mrf.mxu0
      %v1483 = vadd.f32 0.0, %v1482
      %v1484 = vpop.f32.mrf.mxu0
      %1485 = vmatprep.mubr.f32.mxu0 0.0
      %1486 = vmatmul.mubr.f32.gmra.mxu0 %v1361
      %v1487 = vpop.f32.mrf.mxu0
      %v1488 = vadd.f32 0.0, %v1487
      %v1489 = vpop.f32.mrf.mxu0
      %1490 = vmatprep.mubr.f32.mxu0 0.0
      %1491 = vmatmul.mubr.f32.gmra.mxu0 %v1364
      %v1492 = vpop.f32.mrf.mxu0
      %v1493 = vadd.f32 0.0, %v1492
      %v1494 = vpop.f32.mrf.mxu0
      %1495 = vmatprep.mubr.f32.mxu0 0.0
      %1496 = vmatmul.mubr.f32.gmra.mxu0 %v1367
      %v1497 = vpop.f32.mrf.mxu0
      %v1498 = vadd.f32 0.0, %v1497
      %v1499 = vpop.f32.mrf.mxu0
      %1500 = vmatprep.mubr.f32.mxu0 0.0
      %1501 = vmatmul.mubr.f32.gmra.mxu0 %v1370
      %v1502 = vpop.f32.mrf.mxu0
      %v1503 = vadd.f32 0.0, %v1502
      %v1504 = vpop.f32.mrf.mxu0
      %1505 = vmatprep.mubr.f32.mxu0 0.0
      %1506 = vmatmul.mubr.f32.gmra.mxu0 %v1373
      %v1507 = vpop.f32.mrf.mxu0
      %v1508 = vadd.f32 0.0, %v1507
      %v1509 = vpop.f32.mrf.mxu0
      %1510 = vmatprep.mubr.f32.mxu0 0.0
      %1511 = vmatmul.mubr.f32.gmra.mxu0 %v1376
      %v1512 = vpop.f32.mrf.mxu0
      %v1513 = vadd.f32 0.0, %v1512
      %v1514 = vpop.f32.mrf.mxu0
      %1515 = vmatprep.mubr.f32.mxu0 0.0
      %1516 = vmatmul.mubr.f32.gmra.mxu0 %v1379
      %v1517 = vpop.f32.mrf.mxu0
      %v1518 = vadd.f32 0.0, %v1517
      %v1519 = vpop.f32.mrf.mxu0
      %1520 = vmatprep.mubr.f32.mxu0 0.0
      %1521 = vmatmul.mubr.f32.gmra.mxu0 %v1382
      %v1522 = vpop.f32.mrf.mxu0
      %v1523 = vadd.f32 0.0, %v1522
      %v1524 = vpop.f32.mrf.mxu0
      %1525 = vmatprep.mubr.f32.mxu0 0.0
      %1526 = vmatmul.mubr.f32.gmra.mxu0 %v1385
      %v1527 = vpop.f32.mrf.mxu0
      %v1528 = vadd.f32 0.0, %v1527
      %v1529 = vpop.f32.mrf.mxu0
      %1530 = vmatprep.mubr.f32.mxu0 0.0
      %1531 = vmatmul.mubr.f32.gmra.mxu0 %v1388
      %v1532 = vpop.f32.mrf.mxu0
      %v1533 = vadd.f32 0.0, %v1532
      %v1534 = vpop.f32.mrf.mxu0
      %1535 = vmatprep.mubr.f32.mxu0 0.0
      %1536 = vmatmul.mubr.f32.gmra.mxu0 %v1391
      %v1537 = vpop.f32.mrf.mxu0
      %v1538 = vadd.f32 0.0, %v1537
      %v1539 = vpop.f32.mrf.mxu0
      %1540 = vdwg.mxu0
      %v1541 = vadd.f32 %v1311, %v1463
      %v1542 = vadd.f32 %v1312, %v1468
      %v1543 = vadd.f32 %v1313, %v1473
      %v1544 = vadd.f32 %v1314, %v1478
      %v1545 = vadd.f32 %v1315, %v1483
      %v1546 = vadd.f32 %v1316, %v1488
      %v1547 = vadd.f32 %v1317, %v1493
      %v1548 = vadd.f32 %v1318, %v1498
      %v1549 = vadd.f32 %v1319, %v1503
      %v1550 = vadd.f32 %v1320, %v1508
      %v1551 = vadd.f32 %v1321, %v1513
      %v1552 = vadd.f32 %v1322, %v1518
      %v1553 = vadd.f32 %v1323, %v1523
      %v1554 = vadd.f32 %v1324, %v1528
      %v1555 = vadd.f32 %v1325, %v1533
      %v1556 = vadd.f32 %v1326, %v1538
      %s1557 = scalar_lea.vmem %s197, 48
      %v1558 = vld [vmem:[%s1557] sm:$0xff]
      %v1559 = vld [vmem:[%s1557 + $0x8] sm:$0xff]
      %v1560 = vld [vmem:[%s1557 + $0x18] sm:$0xff]
      %v1561 = vld [vmem:[%s1557 + $0x20] sm:$0xff]
      %v1562 = vld [vmem:[%s1557 + $0x30] sm:$0xff]
      %v1563 = vld [vmem:[%s1557 + $0x38] sm:$0xff]
      %v1564 = vld [vmem:[%s1557 + $0x48] sm:$0xff]
      %v1565 = vld [vmem:[%s1557 + $0x50] sm:$0xff]
      %v1566 = vld [vmem:[%s1557 + $0x60] sm:$0xff]
      %v1567 = vld [vmem:[%s1557 + $0x68] sm:$0xff]
      %v1568 = vld [vmem:[%s1557 + $0x78] sm:$0xff]
      %v1569 = vld [vmem:[%s1557 + $0x80] sm:$0xff]
      %v1570 = vld [vmem:[%s1557 + $0x90] sm:$0xff]
      %v1571 = vld [vmem:[%s1557 + $0x98] sm:$0xff]
      %v1572 = vld [vmem:[%s1557 + $0xa8] sm:$0xff]
      %v1573 = vld [vmem:[%s1557 + $0xb0] sm:$0xff]
      %s1574 = scalar_lea.vmem %s1, 24
      %v1575 = vld [vmem:[%s1574] sm:$0x7]
      %v1577 = vsel %vm242, %v1558, 0
      %v1580 = vsel %vm242, %v1559, 0
      %v1583 = vsel %vm242, %v1560, 0
      %v1586 = vsel %vm242, %v1561, 0
      %v1589 = vsel %vm242, %v1562, 0
      %v1592 = vsel %vm242, %v1563, 0
      %v1595 = vsel %vm242, %v1564, 0
      %v1598 = vsel %vm242, %v1565, 0
      %v1601 = vsel %vm242, %v1566, 0
      %v1604 = vsel %vm242, %v1567, 0
      %v1607 = vsel %vm242, %v1568, 0
      %v1610 = vsel %vm242, %v1569, 0
      %v1613 = vsel %vm242, %v1570, 0
      %v1616 = vsel %vm242, %v1571, 0
      %v1619 = vsel %vm242, %v1572, 0
      %v1622 = vsel %vm242, %v1573, 0
      %v1625 = vsel %vm291, %v1575, 0
      %1627 = vmatprep.subr.mxu0 0.0
      %1628 = vmatpush1.msra.mxu0 0.0
      %1629 = vmatprep.subr.mxu0 0.0
      %1630 = vmatpush1.msra.mxu0 0.0
      %1631 = vmatprep.subr.mxu0 0.0
      %1632 = vmatpush1.msra.mxu0 0.0
      %1633 = vmatprep.subr.mxu0 0.0
      %1634 = vmatpush1.msra.mxu0 0.0
      %1635 = vmatprep.subr.mxu0 0.0
      %1636 = vmatpush1.msra.mxu0 0.0
      %1637 = vmatprep.subr.mxu0 0.0
      %1638 = vmatpush1.msra.mxu0 0.0
      %1639 = vmatprep.subr.mxu0 0.0
      %1640 = vmatpush1.msra.mxu0 0.0
      %1641 = vmatprep.subr.mxu0 0.0
      %1642 = vmatpush1.msra.mxu0 0.0
      %1643 = vmatprep.subr.mxu0 0.0
      %1644 = vmatpush1.msra.mxu0 0.0
      %1645 = vmatprep.subr.mxu0 0.0
      %1646 = vmatpush1.msra.mxu0 0.0
      %1647 = vmatprep.subr.mxu0 0.0
      %1648 = vmatpush1.msra.mxu0 0.0
      %1649 = vmatprep.subr.mxu0 0.0
      %1650 = vmatpush1.msra.mxu0 0.0
      %1651 = vmatprep.subr.mxu0 0.0
      %1652 = vmatpush1.msra.mxu0 0.0
      %1653 = vmatprep.subr.mxu0 0.0
      %1654 = vmatpush1.msra.mxu0 0.0
      %1655 = vmatprep.subr.mxu0 0.0
      %1656 = vmatpush1.msra.mxu0 0.0
      %1657 = vmatprep.subr.mxu0 0.0
      %1658 = vmatpush1.msra.mxu0 %v1625
      %1659 = vmatprep.subr.mxu0 0.0
      %1660 = vmatpush2.msra.mxu0 0.0
      %1661 = vmatprep.subr.mxu0 0.0
      %1662 = vmatpush2.msra.mxu0 0.0
      %1663 = vmatprep.subr.mxu0 0.0
      %1664 = vmatpush2.msra.mxu0 0.0
      %1665 = vmatprep.subr.mxu0 0.0
      %1666 = vmatpush2.msra.mxu0 0.0
      %1667 = vmatprep.subr.mxu0 0.0
      %1668 = vmatpush2.msra.mxu0 0.0
      %1669 = vmatprep.subr.mxu0 0.0
      %1670 = vmatpush2.msra.mxu0 0.0
      %1671 = vmatprep.subr.mxu0 0.0
      %1672 = vmatpush2.msra.mxu0 0.0
      %1673 = vmatprep.subr.mxu0 0.0
      %1674 = vmatpush2.msra.mxu0 0.0
      %1675 = vmatprep.subr.mxu0 0.0
      %1676 = vmatpush2.msra.mxu0 0.0
      %1677 = vmatprep.subr.mxu0 0.0
      %1678 = vmatpush2.msra.mxu0 0.0
      %1679 = vmatprep.subr.mxu0 0.0
      %1680 = vmatpush2.msra.mxu0 0.0
      %1681 = vmatprep.subr.mxu0 0.0
      %1682 = vmatpush2.msra.mxu0 0.0
      %1683 = vmatprep.subr.mxu0 0.0
      %1684 = vmatpush2.msra.mxu0 0.0
      %1685 = vmatprep.subr.mxu0 0.0
      %1686 = vmatpush2.msra.mxu0 0.0
      %1687 = vmatprep.subr.mxu0 0.0
      %1688 = vmatpush2.msra.mxu0 0.0
      %1689 = vmatprep.subr.mxu0 0.0
      %1690 = vmatpush2.msra.mxu0 0.0
      %1691 = vmatprep.mubr.f32.mxu0 0.0
      %1692 = vmatmul.mubr.f32.gmra.mxu0 %v1577
      %v1693 = vpop.f32.mrf.mxu0
      %v1694 = vadd.f32 0.0, %v1693
      %v1695 = vpop.f32.mrf.mxu0
      %1696 = vmatprep.mubr.f32.mxu0 0.0
      %1697 = vmatmul.mubr.f32.gmra.mxu0 %v1580
      %v1698 = vpop.f32.mrf.mxu0
      %v1699 = vadd.f32 0.0, %v1698
      %v1700 = vpop.f32.mrf.mxu0
      %1701 = vmatprep.mubr.f32.mxu0 0.0
      %1702 = vmatmul.mubr.f32.gmra.mxu0 %v1583
      %v1703 = vpop.f32.mrf.mxu0
      %v1704 = vadd.f32 0.0, %v1703
      %v1705 = vpop.f32.mrf.mxu0
      %1706 = vmatprep.mubr.f32.mxu0 0.0
      %1707 = vmatmul.mubr.f32.gmra.mxu0 %v1586
      %v1708 = vpop.f32.mrf.mxu0
      %v1709 = vadd.f32 0.0, %v1708
      %v1710 = vpop.f32.mrf.mxu0
      %1711 = vmatprep.mubr.f32.mxu0 0.0
      %1712 = vmatmul.mubr.f32.gmra.mxu0 %v1589
      %v1713 = vpop.f32.mrf.mxu0
      %v1714 = vadd.f32 0.0, %v1713
      %v1715 = vpop.f32.mrf.mxu0
      %1716 = vmatprep.mubr.f32.mxu0 0.0
      %1717 = vmatmul.mubr.f32.gmra.mxu0 %v1592
      %v1718 = vpop.f32.mrf.mxu0
      %v1719 = vadd.f32 0.0, %v1718
      %v1720 = vpop.f32.mrf.mxu0
      %1721 = vmatprep.mubr.f32.mxu0 0.0
      %1722 = vmatmul.mubr.f32.gmra.mxu0 %v1595
      %v1723 = vpop.f32.mrf.mxu0
      %v1724 = vadd.f32 0.0, %v1723
      %v1725 = vpop.f32.mrf.mxu0
      %1726 = vmatprep.mubr.f32.mxu0 0.0
      %1727 = vmatmul.mubr.f32.gmra.mxu0 %v1598
      %v1728 = vpop.f32.mrf.mxu0
      %v1729 = vadd.f32 0.0, %v1728
      %v1730 = vpop.f32.mrf.mxu0
      %1731 = vmatprep.mubr.f32.mxu0 0.0
      %1732 = vmatmul.mubr.f32.gmra.mxu0 %v1601
      %v1733 = vpop.f32.mrf.mxu0
      %v1734 = vadd.f32 0.0, %v1733
      %v1735 = vpop.f32.mrf.mxu0
      %1736 = vmatprep.mubr.f32.mxu0 0.0
      %1737 = vmatmul.mubr.f32.gmra.mxu0 %v1604
      %v1738 = vpop.f32.mrf.mxu0
      %v1739 = vadd.f32 0.0, %v1738
      %v1740 = vpop.f32.mrf.mxu0
      %1741 = vmatprep.mubr.f32.mxu0 0.0
      %1742 = vmatmul.mubr.f32.gmra.mxu0 %v1607
      %v1743 = vpop.f32.mrf.mxu0
      %v1744 = vadd.f32 0.0, %v1743
      %v1745 = vpop.f32.mrf.mxu0
      %1746 = vmatprep.mubr.f32.mxu0 0.0
      %1747 = vmatmul.mubr.f32.gmra.mxu0 %v1610
      %v1748 = vpop.f32.mrf.mxu0
      %v1749 = vadd.f32 0.0, %v1748
      %v1750 = vpop.f32.mrf.mxu0
      %1751 = vmatprep.mubr.f32.mxu0 0.0
      %1752 = vmatmul.mubr.f32.gmra.mxu0 %v1613
      %v1753 = vpop.f32.mrf.mxu0
      %v1754 = vadd.f32 0.0, %v1753
      %v1755 = vpop.f32.mrf.mxu0
      %1756 = vmatprep.mubr.f32.mxu0 0.0
      %1757 = vmatmul.mubr.f32.gmra.mxu0 %v1616
      %v1758 = vpop.f32.mrf.mxu0
      %v1759 = vadd.f32 0.0, %v1758
      %v1760 = vpop.f32.mrf.mxu0
      %1761 = vmatprep.mubr.f32.mxu0 0.0
      %1762 = vmatmul.mubr.f32.gmra.mxu0 %v1619
      %v1763 = vpop.f32.mrf.mxu0
      %v1764 = vadd.f32 0.0, %v1763
      %v1765 = vpop.f32.mrf.mxu0
      %1766 = vmatprep.mubr.f32.mxu0 0.0
      %1767 = vmatmul.mubr.f32.gmra.mxu0 %v1622
      %v1768 = vpop.f32.mrf.mxu0
      %v1769 = vadd.f32 0.0, %v1768
      %v1770 = vpop.f32.mrf.mxu0
      %1771 = vdwg.mxu0
      %v1772 = vadd.f32 %v1541, %v1694
      %v1773 = vadd.f32 %v1542, %v1699
      %v1774 = vadd.f32 %v1543, %v1704
      %v1775 = vadd.f32 %v1544, %v1709
      %v1776 = vadd.f32 %v1545, %v1714
      %v1777 = vadd.f32 %v1546, %v1719
      %v1778 = vadd.f32 %v1547, %v1724
      %v1779 = vadd.f32 %v1548, %v1729
      %v1780 = vadd.f32 %v1549, %v1734
      %v1781 = vadd.f32 %v1550, %v1739
      %v1782 = vadd.f32 %v1551, %v1744
      %v1783 = vadd.f32 %v1552, %v1749
      %v1784 = vadd.f32 %v1553, %v1754
      %v1785 = vadd.f32 %v1554, %v1759
      %v1786 = vadd.f32 %v1555, %v1764
      %v1787 = vadd.f32 %v1556, %v1769
      %v1788 = vld [vmem:[%s1557 + $0x1] sm:$0xff]
      %v1789 = vld [vmem:[%s1557 + $0x9] sm:$0xff]
      %v1790 = vld [vmem:[%s1557 + $0x19] sm:$0xff]
      %v1791 = vld [vmem:[%s1557 + $0x21] sm:$0xff]
      %v1792 = vld [vmem:[%s1557 + $0x31] sm:$0xff]
      %v1793 = vld [vmem:[%s1557 + $0x39] sm:$0xff]
      %v1794 = vld [vmem:[%s1557 + $0x49] sm:$0xff]
      %v1795 = vld [vmem:[%s1557 + $0x51] sm:$0xff]
      %v1796 = vld [vmem:[%s1557 + $0x61] sm:$0xff]
      %v1797 = vld [vmem:[%s1557 + $0x69] sm:$0xff]
      %v1798 = vld [vmem:[%s1557 + $0x79] sm:$0xff]
      %v1799 = vld [vmem:[%s1557 + $0x81] sm:$0xff]
      %v1800 = vld [vmem:[%s1557 + $0x91] sm:$0xff]
      %v1801 = vld [vmem:[%s1557 + $0x99] sm:$0xff]
      %v1802 = vld [vmem:[%s1557 + $0xa9] sm:$0xff]
      %v1803 = vld [vmem:[%s1557 + $0xb1] sm:$0xff]
      %s1804 = scalar_lea.vmem %s1, 28
      %v1805 = vld [vmem:[%s1804] sm:$0x7]
      %v1807 = vsel %vm242, %v1788, 0
      %v1810 = vsel %vm242, %v1789, 0
      %v1813 = vsel %vm242, %v1790, 0
      %v1816 = vsel %vm242, %v1791, 0
      %v1819 = vsel %vm242, %v1792, 0
      %v1822 = vsel %vm242, %v1793, 0
      %v1825 = vsel %vm242, %v1794, 0
      %v1828 = vsel %vm242, %v1795, 0
      %v1831 = vsel %vm242, %v1796, 0
      %v1834 = vsel %vm242, %v1797, 0
      %v1837 = vsel %vm242, %v1798, 0
      %v1840 = vsel %vm242, %v1799, 0
      %v1843 = vsel %vm242, %v1800, 0
      %v1846 = vsel %vm242, %v1801, 0
      %v1849 = vsel %vm242, %v1802, 0
      %v1852 = vsel %vm242, %v1803, 0
      %v1855 = vsel %vm291, %v1805, 0
      %1857 = vmatprep.subr.mxu0 0.0
      %1858 = vmatpush1.msra.mxu0 0.0
      %1859 = vmatprep.subr.mxu0 0.0
      %1860 = vmatpush1.msra.mxu0 0.0
      %1861 = vmatprep.subr.mxu0 0.0
      %1862 = vmatpush1.msra.mxu0 0.0
      %1863 = vmatprep.subr.mxu0 0.0
      %1864 = vmatpush1.msra.mxu0 0.0
      %1865 = vmatprep.subr.mxu0 0.0
      %1866 = vmatpush1.msra.mxu0 0.0
      %1867 = vmatprep.subr.mxu0 0.0
      %1868 = vmatpush1.msra.mxu0 0.0
      %1869 = vmatprep.subr.mxu0 0.0
      %1870 = vmatpush1.msra.mxu0 0.0
      %1871 = vmatprep.subr.mxu0 0.0
      %1872 = vmatpush1.msra.mxu0 0.0
      %1873 = vmatprep.subr.mxu0 0.0
      %1874 = vmatpush1.msra.mxu0 0.0
      %1875 = vmatprep.subr.mxu0 0.0
      %1876 = vmatpush1.msra.mxu0 0.0
      %1877 = vmatprep.subr.mxu0 0.0
      %1878 = vmatpush1.msra.mxu0 0.0
      %1879 = vmatprep.subr.mxu0 0.0
      %1880 = vmatpush1.msra.mxu0 0.0
      %1881 = vmatprep.subr.mxu0 0.0
      %1882 = vmatpush1.msra.mxu0 0.0
      %1883 = vmatprep.subr.mxu0 0.0
      %1884 = vmatpush1.msra.mxu0 0.0
      %1885 = vmatprep.subr.mxu0 0.0
      %1886 = vmatpush1.msra.mxu0 0.0
      %1887 = vmatprep.subr.mxu0 0.0
      %1888 = vmatpush1.msra.mxu0 %v1855
      %1889 = vmatprep.subr.mxu0 0.0
      %1890 = vmatpush2.msra.mxu0 0.0
      %1891 = vmatprep.subr.mxu0 0.0
      %1892 = vmatpush2.msra.mxu0 0.0
      %1893 = vmatprep.subr.mxu0 0.0
      %1894 = vmatpush2.msra.mxu0 0.0
      %1895 = vmatprep.subr.mxu0 0.0
      %1896 = vmatpush2.msra.mxu0 0.0
      %1897 = vmatprep.subr.mxu0 0.0
      %1898 = vmatpush2.msra.mxu0 0.0
      %1899 = vmatprep.subr.mxu0 0.0
      %1900 = vmatpush2.msra.mxu0 0.0
      %1901 = vmatprep.subr.mxu0 0.0
      %1902 = vmatpush2.msra.mxu0 0.0
      %1903 = vmatprep.subr.mxu0 0.0
      %1904 = vmatpush2.msra.mxu0 0.0
      %1905 = vmatprep.subr.mxu0 0.0
      %1906 = vmatpush2.msra.mxu0 0.0
      %1907 = vmatprep.subr.mxu0 0.0
      %1908 = vmatpush2.msra.mxu0 0.0
      %1909 = vmatprep.subr.mxu0 0.0
      %1910 = vmatpush2.msra.mxu0 0.0
      %1911 = vmatprep.subr.mxu0 0.0
      %1912 = vmatpush2.msra.mxu0 0.0
      %1913 = vmatprep.subr.mxu0 0.0
      %1914 = vmatpush2.msra.mxu0 0.0
      %1915 = vmatprep.subr.mxu0 0.0
      %1916 = vmatpush2.msra.mxu0 0.0
      %1917 = vmatprep.subr.mxu0 0.0
      %1918 = vmatpush2.msra.mxu0 0.0
      %1919 = vmatprep.subr.mxu0 0.0
      %1920 = vmatpush2.msra.mxu0 0.0
      %1921 = vmatprep.mubr.f32.mxu0 0.0
      %1922 = vmatmul.mubr.f32.gmra.mxu0 %v1807
      %v1923 = vpop.f32.mrf.mxu0
      %v1924 = vadd.f32 0.0, %v1923
      %v1925 = vpop.f32.mrf.mxu0
      %1926 = vmatprep.mubr.f32.mxu0 0.0
      %1927 = vmatmul.mubr.f32.gmra.mxu0 %v1810
      %v1928 = vpop.f32.mrf.mxu0
      %v1929 = vadd.f32 0.0, %v1928
      %v1930 = vpop.f32.mrf.mxu0
      %1931 = vmatprep.mubr.f32.mxu0 0.0
      %1932 = vmatmul.mubr.f32.gmra.mxu0 %v1813
      %v1933 = vpop.f32.mrf.mxu0
      %v1934 = vadd.f32 0.0, %v1933
      %v1935 = vpop.f32.mrf.mxu0
      %1936 = vmatprep.mubr.f32.mxu0 0.0
      %1937 = vmatmul.mubr.f32.gmra.mxu0 %v1816
      %v1938 = vpop.f32.mrf.mxu0
      %v1939 = vadd.f32 0.0, %v1938
      %v1940 = vpop.f32.mrf.mxu0
      %1941 = vmatprep.mubr.f32.mxu0 0.0
      %1942 = vmatmul.mubr.f32.gmra.mxu0 %v1819
      %v1943 = vpop.f32.mrf.mxu0
      %v1944 = vadd.f32 0.0, %v1943
      %v1945 = vpop.f32.mrf.mxu0
      %1946 = vmatprep.mubr.f32.mxu0 0.0
      %1947 = vmatmul.mubr.f32.gmra.mxu0 %v1822
      %v1948 = vpop.f32.mrf.mxu0
      %v1949 = vadd.f32 0.0, %v1948
      %v1950 = vpop.f32.mrf.mxu0
      %1951 = vmatprep.mubr.f32.mxu0 0.0
      %1952 = vmatmul.mubr.f32.gmra.mxu0 %v1825
      %v1953 = vpop.f32.mrf.mxu0
      %v1954 = vadd.f32 0.0, %v1953
      %v1955 = vpop.f32.mrf.mxu0
      %1956 = vmatprep.mubr.f32.mxu0 0.0
      %1957 = vmatmul.mubr.f32.gmra.mxu0 %v1828
      %v1958 = vpop.f32.mrf.mxu0
      %v1959 = vadd.f32 0.0, %v1958
      %v1960 = vpop.f32.mrf.mxu0
      %1961 = vmatprep.mubr.f32.mxu0 0.0
      %1962 = vmatmul.mubr.f32.gmra.mxu0 %v1831
      %v1963 = vpop.f32.mrf.mxu0
      %v1964 = vadd.f32 0.0, %v1963
      %v1965 = vpop.f32.mrf.mxu0
      %1966 = vmatprep.mubr.f32.mxu0 0.0
      %1967 = vmatmul.mubr.f32.gmra.mxu0 %v1834
      %v1968 = vpop.f32.mrf.mxu0
      %v1969 = vadd.f32 0.0, %v1968
      %v1970 = vpop.f32.mrf.mxu0
      %1971 = vmatprep.mubr.f32.mxu0 0.0
      %1972 = vmatmul.mubr.f32.gmra.mxu0 %v1837
      %v1973 = vpop.f32.mrf.mxu0
      %v1974 = vadd.f32 0.0, %v1973
      %v1975 = vpop.f32.mrf.mxu0
      %1976 = vmatprep.mubr.f32.mxu0 0.0
      %1977 = vmatmul.mubr.f32.gmra.mxu0 %v1840
      %v1978 = vpop.f32.mrf.mxu0
      %v1979 = vadd.f32 0.0, %v1978
      %v1980 = vpop.f32.mrf.mxu0
      %1981 = vmatprep.mubr.f32.mxu0 0.0
      %1982 = vmatmul.mubr.f32.gmra.mxu0 %v1843
      %v1983 = vpop.f32.mrf.mxu0
      %v1984 = vadd.f32 0.0, %v1983
      %v1985 = vpop.f32.mrf.mxu0
      %1986 = vmatprep.mubr.f32.mxu0 0.0
      %1987 = vmatmul.mubr.f32.gmra.mxu0 %v1846
      %v1988 = vpop.f32.mrf.mxu0
      %v1989 = vadd.f32 0.0, %v1988
      %v1990 = vpop.f32.mrf.mxu0
      %1991 = vmatprep.mubr.f32.mxu0 0.0
      %1992 = vmatmul.mubr.f32.gmra.mxu0 %v1849
      %v1993 = vpop.f32.mrf.mxu0
      %v1994 = vadd.f32 0.0, %v1993
      %v1995 = vpop.f32.mrf.mxu0
      %1996 = vmatprep.mubr.f32.mxu0 0.0
      %1997 = vmatmul.mubr.f32.gmra.mxu0 %v1852
      %v1998 = vpop.f32.mrf.mxu0
      %v1999 = vadd.f32 0.0, %v1998
      %v2000 = vpop.f32.mrf.mxu0
      %2001 = vdwg.mxu0
      %v2002 = vadd.f32 %v1772, %v1924
      %v2003 = vadd.f32 %v1773, %v1929
      %v2004 = vadd.f32 %v1774, %v1934
      %v2005 = vadd.f32 %v1775, %v1939
      %v2006 = vadd.f32 %v1776, %v1944
      %v2007 = vadd.f32 %v1777, %v1949
      %v2008 = vadd.f32 %v1778, %v1954
      %v2009 = vadd.f32 %v1779, %v1959
      %v2010 = vadd.f32 %v1780, %v1964
      %v2011 = vadd.f32 %v1781, %v1969
      %v2012 = vadd.f32 %v1782, %v1974
      %v2013 = vadd.f32 %v1783, %v1979
      %v2014 = vadd.f32 %v1784, %v1984
      %v2015 = vadd.f32 %v1785, %v1989
      %v2016 = vadd.f32 %v1786, %v1994
      %v2017 = vadd.f32 %v1787, %v1999
      %v2018 = vld [vmem:[%s1557 + $0x2] sm:$0xff]
      %v2019 = vld [vmem:[%s1557 + $0xa] sm:$0xff]
      %v2020 = vld [vmem:[%s1557 + $0x1a] sm:$0xff]
      %v2021 = vld [vmem:[%s1557 + $0x22] sm:$0xff]
      %v2022 = vld [vmem:[%s1557 + $0x32] sm:$0xff]
      %v2023 = vld [vmem:[%s1557 + $0x3a] sm:$0xff]
      %v2024 = vld [vmem:[%s1557 + $0x4a] sm:$0xff]
      %v2025 = vld [vmem:[%s1557 + $0x52] sm:$0xff]
      %v2026 = vld [vmem:[%s1557 + $0x62] sm:$0xff]
      %v2027 = vld [vmem:[%s1557 + $0x6a] sm:$0xff]
      %v2028 = vld [vmem:[%s1557 + $0x7a] sm:$0xff]
      %v2029 = vld [vmem:[%s1557 + $0x82] sm:$0xff]
      %v2030 = vld [vmem:[%s1557 + $0x92] sm:$0xff]
      %v2031 = vld [vmem:[%s1557 + $0x9a] sm:$0xff]
      %v2032 = vld [vmem:[%s1557 + $0xaa] sm:$0xff]
      %v2033 = vld [vmem:[%s1557 + $0xb2] sm:$0xff]
      %s2034 = scalar_lea.vmem %s1, 32
      %v2035 = vld [vmem:[%s2034] sm:$0x7]
      %v2037 = vsel %vm242, %v2018, 0
      %v2040 = vsel %vm242, %v2019, 0
      %v2043 = vsel %vm242, %v2020, 0
      %v2046 = vsel %vm242, %v2021, 0
      %v2049 = vsel %vm242, %v2022, 0
      %v2052 = vsel %vm242, %v2023, 0
      %v2055 = vsel %vm242, %v2024, 0
      %v2058 = vsel %vm242, %v2025, 0
      %v2061 = vsel %vm242, %v2026, 0
      %v2064 = vsel %vm242, %v2027, 0
      %v2067 = vsel %vm242, %v2028, 0
      %v2070 = vsel %vm242, %v2029, 0
      %v2073 = vsel %vm242, %v2030, 0
      %v2076 = vsel %vm242, %v2031, 0
      %v2079 = vsel %vm242, %v2032, 0
      %v2082 = vsel %vm242, %v2033, 0
      %v2085 = vsel %vm291, %v2035, 0
      %2087 = vmatprep.subr.mxu0 0.0
      %2088 = vmatpush1.msra.mxu0 0.0
      %2089 = vmatprep.subr.mxu0 0.0
      %2090 = vmatpush1.msra.mxu0 0.0
      %2091 = vmatprep.subr.mxu0 0.0
      %2092 = vmatpush1.msra.mxu0 0.0
      %2093 = vmatprep.subr.mxu0 0.0
      %2094 = vmatpush1.msra.mxu0 0.0
      %2095 = vmatprep.subr.mxu0 0.0
      %2096 = vmatpush1.msra.mxu0 0.0
      %2097 = vmatprep.subr.mxu0 0.0
      %2098 = vmatpush1.msra.mxu0 0.0
      %2099 = vmatprep.subr.mxu0 0.0
      %2100 = vmatpush1.msra.mxu0 0.0
      %2101 = vmatprep.subr.mxu0 0.0
      %2102 = vmatpush1.msra.mxu0 0.0
      %2103 = vmatprep.subr.mxu0 0.0
      %2104 = vmatpush1.msra.mxu0 0.0
      %2105 = vmatprep.subr.mxu0 0.0
      %2106 = vmatpush1.msra.mxu0 0.0
      %2107 = vmatprep.subr.mxu0 0.0
      %2108 = vmatpush1.msra.mxu0 0.0
      %2109 = vmatprep.subr.mxu0 0.0
      %2110 = vmatpush1.msra.mxu0 0.0
      %2111 = vmatprep.subr.mxu0 0.0
      %2112 = vmatpush1.msra.mxu0 0.0
      %2113 = vmatprep.subr.mxu0 0.0
      %2114 = vmatpush1.msra.mxu0 0.0
      %2115 = vmatprep.subr.mxu0 0.0
      %2116 = vmatpush1.msra.mxu0 0.0
      %2117 = vmatprep.subr.mxu0 0.0
      %2118 = vmatpush1.msra.mxu0 %v2085
      %2119 = vmatprep.subr.mxu0 0.0
      %2120 = vmatpush2.msra.mxu0 0.0
      %2121 = vmatprep.subr.mxu0 0.0
      %2122 = vmatpush2.msra.mxu0 0.0
      %2123 = vmatprep.subr.mxu0 0.0
      %2124 = vmatpush2.msra.mxu0 0.0
      %2125 = vmatprep.subr.mxu0 0.0
      %2126 = vmatpush2.msra.mxu0 0.0
      %2127 = vmatprep.subr.mxu0 0.0
      %2128 = vmatpush2.msra.mxu0 0.0
      %2129 = vmatprep.subr.mxu0 0.0
      %2130 = vmatpush2.msra.mxu0 0.0
      %2131 = vmatprep.subr.mxu0 0.0
      %2132 = vmatpush2.msra.mxu0 0.0
      %2133 = vmatprep.subr.mxu0 0.0
      %2134 = vmatpush2.msra.mxu0 0.0
      %2135 = vmatprep.subr.mxu0 0.0
      %2136 = vmatpush2.msra.mxu0 0.0
      %2137 = vmatprep.subr.mxu0 0.0
      %2138 = vmatpush2.msra.mxu0 0.0
      %2139 = vmatprep.subr.mxu0 0.0
      %2140 = vmatpush2.msra.mxu0 0.0
      %2141 = vmatprep.subr.mxu0 0.0
      %2142 = vmatpush2.msra.mxu0 0.0
      %2143 = vmatprep.subr.mxu0 0.0
      %2144 = vmatpush2.msra.mxu0 0.0
      %2145 = vmatprep.subr.mxu0 0.0
      %2146 = vmatpush2.msra.mxu0 0.0
      %2147 = vmatprep.subr.mxu0 0.0
      %2148 = vmatpush2.msra.mxu0 0.0
      %2149 = vmatprep.subr.mxu0 0.0
      %2150 = vmatpush2.msra.mxu0 0.0
      %2151 = vmatprep.mubr.f32.mxu0 0.0
      %2152 = vmatmul.mubr.f32.gmra.mxu0 %v2037
      %v2153 = vpop.f32.mrf.mxu0
      %v2154 = vadd.f32 0.0, %v2153
      %v2155 = vpop.f32.mrf.mxu0
      %2156 = vmatprep.mubr.f32.mxu0 0.0
      %2157 = vmatmul.mubr.f32.gmra.mxu0 %v2040
      %v2158 = vpop.f32.mrf.mxu0
      %v2159 = vadd.f32 0.0, %v2158
      %v2160 = vpop.f32.mrf.mxu0
      %2161 = vmatprep.mubr.f32.mxu0 0.0
      %2162 = vmatmul.mubr.f32.gmra.mxu0 %v2043
      %v2163 = vpop.f32.mrf.mxu0
      %v2164 = vadd.f32 0.0, %v2163
      %v2165 = vpop.f32.mrf.mxu0
      %2166 = vmatprep.mubr.f32.mxu0 0.0
      %2167 = vmatmul.mubr.f32.gmra.mxu0 %v2046
      %v2168 = vpop.f32.mrf.mxu0
      %v2169 = vadd.f32 0.0, %v2168
      %v2170 = vpop.f32.mrf.mxu0
      %2171 = vmatprep.mubr.f32.mxu0 0.0
      %2172 = vmatmul.mubr.f32.gmra.mxu0 %v2049
      %v2173 = vpop.f32.mrf.mxu0
      %v2174 = vadd.f32 0.0, %v2173
      %v2175 = vpop.f32.mrf.mxu0
      %2176 = vmatprep.mubr.f32.mxu0 0.0
      %2177 = vmatmul.mubr.f32.gmra.mxu0 %v2052
      %v2178 = vpop.f32.mrf.mxu0
      %v2179 = vadd.f32 0.0, %v2178
      %v2180 = vpop.f32.mrf.mxu0
      %2181 = vmatprep.mubr.f32.mxu0 0.0
      %2182 = vmatmul.mubr.f32.gmra.mxu0 %v2055
      %v2183 = vpop.f32.mrf.mxu0
      %v2184 = vadd.f32 0.0, %v2183
      %v2185 = vpop.f32.mrf.mxu0
      %2186 = vmatprep.mubr.f32.mxu0 0.0
      %2187 = vmatmul.mubr.f32.gmra.mxu0 %v2058
      %v2188 = vpop.f32.mrf.mxu0
      %v2189 = vadd.f32 0.0, %v2188
      %v2190 = vpop.f32.mrf.mxu0
      %2191 = vmatprep.mubr.f32.mxu0 0.0
      %2192 = vmatmul.mubr.f32.gmra.mxu0 %v2061
      %v2193 = vpop.f32.mrf.mxu0
      %v2194 = vadd.f32 0.0, %v2193
      %v2195 = vpop.f32.mrf.mxu0
      %2196 = vmatprep.mubr.f32.mxu0 0.0
      %2197 = vmatmul.mubr.f32.gmra.mxu0 %v2064
      %v2198 = vpop.f32.mrf.mxu0
      %v2199 = vadd.f32 0.0, %v2198
      %v2200 = vpop.f32.mrf.mxu0
      %2201 = vmatprep.mubr.f32.mxu0 0.0
      %2202 = vmatmul.mubr.f32.gmra.mxu0 %v2067
      %v2203 = vpop.f32.mrf.mxu0
      %v2204 = vadd.f32 0.0, %v2203
      %v2205 = vpop.f32.mrf.mxu0
      %2206 = vmatprep.mubr.f32.mxu0 0.0
      %2207 = vmatmul.mubr.f32.gmra.mxu0 %v2070
      %v2208 = vpop.f32.mrf.mxu0
      %v2209 = vadd.f32 0.0, %v2208
      %v2210 = vpop.f32.mrf.mxu0
      %2211 = vmatprep.mubr.f32.mxu0 0.0
      %2212 = vmatmul.mubr.f32.gmra.mxu0 %v2073
      %v2213 = vpop.f32.mrf.mxu0
      %v2214 = vadd.f32 0.0, %v2213
      %v2215 = vpop.f32.mrf.mxu0
      %2216 = vmatprep.mubr.f32.mxu0 0.0
      %2217 = vmatmul.mubr.f32.gmra.mxu0 %v2076
      %v2218 = vpop.f32.mrf.mxu0
      %v2219 = vadd.f32 0.0, %v2218
      %v2220 = vpop.f32.mrf.mxu0
      %2221 = vmatprep.mubr.f32.mxu0 0.0
      %2222 = vmatmul.mubr.f32.gmra.mxu0 %v2079
      %v2223 = vpop.f32.mrf.mxu0
      %v2224 = vadd.f32 0.0, %v2223
      %v2225 = vpop.f32.mrf.mxu0
      %2226 = vmatprep.mubr.f32.mxu0 0.0
      %2227 = vmatmul.mubr.f32.gmra.mxu0 %v2082
      %v2228 = vpop.f32.mrf.mxu0
      %v2229 = vadd.f32 0.0, %v2228
      %v2230 = vpop.f32.mrf.mxu0
      %2231 = vdwg.mxu0
      %v2232 = vadd.f32 %v2002, %v2154
      %v2233 = vadd.f32 %v2003, %v2159
      %v2234 = vadd.f32 %v2004, %v2164
      %v2235 = vadd.f32 %v2005, %v2169
      %v2236 = vadd.f32 %v2006, %v2174
      %v2237 = vadd.f32 %v2007, %v2179
      %v2238 = vadd.f32 %v2008, %v2184
      %v2239 = vadd.f32 %v2009, %v2189
      %v2240 = vadd.f32 %v2010, %v2194
      %v2241 = vadd.f32 %v2011, %v2199
      %v2242 = vadd.f32 %v2012, %v2204
      %v2243 = vadd.f32 %v2013, %v2209
      %v2244 = vadd.f32 %v2014, %v2214
      %v2245 = vadd.f32 %v2015, %v2219
      %v2246 = vadd.f32 %v2016, %v2224
      %v2247 = vadd.f32 %v2017, %v2229
      %v2248 = vld [vmem:[%s2] sm:$0x1]
      %v2250 = vlaneseq
      %v2251 = vshrl.u32 %v2250, 7
      %v2252 = vsub.s32 0, %v2251
      %v2253 = vrot.slane %v2248, %v2252
      %v2255 = vadd.f32 %v2232, %v2253
      %v2256 = vadd.f32 %v2233, %v2253
      %v2257 = vadd.f32 %v2234, %v2253
      %v2258 = vadd.f32 %v2235, %v2253
      %v2259 = vadd.f32 %v2236, %v2253
      %v2260 = vadd.f32 %v2237, %v2253
      %v2261 = vadd.f32 %v2238, %v2253
      %v2262 = vadd.f32 %v2239, %v2253
      %v2263 = vadd.f32 %v2240, %v2253
      %v2264 = vadd.f32 %v2241, %v2253
      %v2265 = vadd.f32 %v2242, %v2253
      %v2266 = vadd.f32 %v2243, %v2253
      %v2267 = vadd.f32 %v2244, %v2253
      %v2268 = vadd.f32 %v2245, %v2253
      %v2269 = vadd.f32 %v2246, %v2253
      %v2270 = vadd.f32 %v2247, %v2253
      %v2271 = vmax.f32 %v2255, 0.0
      %v2272 = vmax.f32 %v2256, 0.0
      %v2273 = vmax.f32 %v2257, 0.0
      %v2274 = vmax.f32 %v2258, 0.0
      %v2275 = vmax.f32 %v2259, 0.0
      %v2276 = vmax.f32 %v2260, 0.0
      %v2277 = vmax.f32 %v2261, 0.0
      %v2278 = vmax.f32 %v2262, 0.0
      %v2279 = vmax.f32 %v2263, 0.0
      %v2280 = vmax.f32 %v2264, 0.0
      %v2281 = vmax.f32 %v2265, 0.0
      %v2282 = vmax.f32 %v2266, 0.0
      %v2283 = vmax.f32 %v2267, 0.0
      %v2284 = vmax.f32 %v2268, 0.0
      %v2285 = vmax.f32 %v2269, 0.0
      %v2286 = vmax.f32 %v2270, 0.0
      %v2287 = vpack.c.bf16 %v2272, %v2271
      %v2288 = vpack.c.bf16 %v2274, %v2273
      %v2289 = vpack.c.bf16 %v2276, %v2275
      %v2290 = vpack.c.bf16 %v2278, %v2277
      %v2291 = vpack.c.bf16 %v2280, %v2279
      %v2292 = vpack.c.bf16 %v2282, %v2281
      %v2293 = vpack.c.bf16 %v2284, %v2283
      %v2294 = vpack.c.bf16 %v2286, %v2285
      %v2303 = vunpack.c.l.b16 %v2287
      %v2304 = vunpack.c.h.b16 %v2287
      %v2305 = vunpack.c.l.b16 %v2288
      %v2306 = vunpack.c.h.b16 %v2288
      %v2307 = vunpack.c.l.b16 %v2289
      %v2308 = vunpack.c.h.b16 %v2289
      %v2309 = vunpack.c.l.b16 %v2290
      %v2310 = vunpack.c.h.b16 %v2290
      %v2311 = vunpack.c.l.b16 %v2291
      %v2312 = vunpack.c.h.b16 %v2291
      %v2313 = vunpack.c.l.b16 %v2292
      %v2314 = vunpack.c.h.b16 %v2292
      %v2315 = vunpack.c.l.b16 %v2293
      %v2316 = vunpack.c.h.b16 %v2293
      %v2317 = vunpack.c.l.b16 %v2294
      %v2318 = vunpack.c.h.b16 %v2294
      %v2319 = vpack.c.b16 %v2303, %v2303
      %v2320 = vpack.c.b16 %v2304, %v2304
      %v2321 = vpack.c.b16 %v2305, %v2305
      %v2322 = vpack.c.b16 %v2306, %v2306
      %v2323 = vpack.c.b16 %v2307, %v2307
      %v2324 = vpack.c.b16 %v2308, %v2308
      %v2325 = vpack.c.b16 %v2309, %v2309
      %v2326 = vpack.c.b16 %v2310, %v2310
      %v2327 = vpack.c.b16 %v2311, %v2311
      %v2328 = vpack.c.b16 %v2312, %v2312
      %v2329 = vpack.c.b16 %v2313, %v2313
      %v2330 = vpack.c.b16 %v2314, %v2314
      %v2331 = vpack.c.b16 %v2315, %v2315
      %v2332 = vpack.c.b16 %v2316, %v2316
      %v2333 = vpack.c.b16 %v2317, %v2317
      %v2334 = vpack.c.b16 %v2318, %v2318
      %vm2351 = vcmask 125952
      %2352 = vst.msk [vmem:[%s206] sm:$0xf] %vm2351, %v2319
      %2353 = vst.msk [vmem:[%s206 + $0x4] sm:$0xf] %vm2351, %v2320
      %2354 = vst.msk [vmem:[%s206 + $0x8] sm:$0xf] %vm2351, %v2321
      %2355 = vst.msk [vmem:[%s206 + $0xc] sm:$0xf] %vm2351, %v2322
      %2356 = vst.msk [vmem:[%s206 + $0x10] sm:$0xf] %vm2351, %v2323
      %2357 = vst.msk [vmem:[%s206 + $0x14] sm:$0xf] %vm2351, %v2324
      %2358 = vst.msk [vmem:[%s206 + $0x18] sm:$0xf] %vm2351, %v2325
      %2359 = vst.msk [vmem:[%s206 + $0x1c] sm:$0xf] %vm2351, %v2326
      %2360 = vst.msk [vmem:[%s206 + $0x20] sm:$0xf] %vm2351, %v2327
      %2361 = vst.msk [vmem:[%s206 + $0x24] sm:$0xf] %vm2351, %v2328
      %2362 = vst.msk [vmem:[%s206 + $0x28] sm:$0xf] %vm2351, %v2329
      %2363 = vst.msk [vmem:[%s206 + $0x2c] sm:$0xf] %vm2351, %v2330
      %2364 = vst.msk [vmem:[%s206 + $0x30] sm:$0xf] %vm2351, %v2331
      %2365 = vst.msk [vmem:[%s206 + $0x34] sm:$0xf] %vm2351, %v2332
      %2366 = vst.msk [vmem:[%s206 + $0x38] sm:$0xf] %vm2351, %v2333
      %2367 = vst.msk [vmem:[%s206 + $0x3c] sm:$0xf] %vm2351, %v2334
      %p2368 = scmp.lt.s32.totalorder %s18, 1
      %s2369 = scalar_select %p2368, %s18, 1
      %p2370 = scmp.lt.s32.totalorder %s19, 1
      %s2371 = scalar_select %p2370, %s19, 1
      %s2372 = smul.addr %s2371, 16
      %s2373 = smul.addr %s2369, 32
      %s2374 = sadd.s32 %s2372, %s2373
      %s2375 = smul.addr %s2374, 4
      %s2376 = scalar_lea.vmem %s3, %s2375
      // Predicated region
      $region33: #{tpu_custom_call.1} parent=31 // pred_check
        %p2377 = pneg %p116
      $region34: #{tpu_custom_call.1} parent=31 // pred_check_branch
        %2379 = sbr.rel (%p2377) target = $region36
      $region35: #{tpu_custom_call.1} parent=31 // pred_region
        _
      $region36: #{tpu_custom_call.1} parent=31 // pred_fallthru
        _
    $region32: #{tpu_custom_call.1} parent=5 // pred_fallthru
      _
    %p2380 = scmp.le.s32.totalorder 2, %s9
    // Predicated region
    $region37: #{tpu_custom_call.1} parent=5 // pred_check
      %p2381 = pneg %p2380
    $region38: #{tpu_custom_call.1} parent=5 // pred_check_branch
      %2383 = sbr.rel (%p2381) target = $region40
    $region39: #{tpu_custom_call.1} parent=5 // pred_region
      %s2384 = ssub.s32 %s9, 2
      // Predicated region
      $region41: #{tpu_custom_call.1} parent=39 // pred_check
        %p2385 = pneg %p122
      $region42: #{tpu_custom_call.1} parent=39 // pred_check_branch
        %2387 = sbr.rel (%p2385) target = $region44
      $region43: #{tpu_custom_call.1} parent=39 // pred_region
        %p2388 = scmp.lt.s32.totalorder %s20, 1
        %s2389 = scalar_select %p2388, %s20, 1
        %p2390 = scmp.lt.s32.totalorder %s21, 1
        %s2391 = scalar_select %p2390, %s21, 1
        %s2392 = smul.addr %s2391, 16
        %s2393 = smul.addr %s2389, 32
        %s2394 = sadd.s32 %s2392, %s2393
        %s2395 = smul.addr %s2394, 4
        %s2396 = scalar_lea.vmem %s3, %s2395
      $region44: #{tpu_custom_call.1} parent=39 // pred_fallthru
        _
    $region40: #{tpu_custom_call.1} parent=5 // pred_fallthru
      _
  $region6: #{tpu_custom_call.1} parent=0 // loop_footer
    %s13 = sadd.s32 1, %s9
  $region7: #{tpu_custom_call.1} parent=0 // loop_footer_branch
    %8 = sbr.rel target = $region3
  $region8: #{tpu_custom_call.1} parent=0 // loop_exit
    _

</llo_original>
